<compile_context>
chip_gen: v7x
topology: tpu7x:2x2x1
jax: 0.10.0
libtpu: 0.0.40
codegen_flags: <defaults>
</compile_context>

<pallas_src>
import functools
import math

import numpy as np

import jax
import jax.numpy as jnp
from jax import lax
from jax.experimental import pallas as pl
from jax.experimental.pallas import tpu as pltpu

_NEG_INF = -1e30
_VMEM_LIMIT = 64 * 1024 * 1024   # explicit scoped-VMEM cap (safe for v5e/v6e/v7x)


def _pick_tile(dim, target, align):
    """Largest tile <= target that divides `dim` and is a multiple of `align`;
    falls back to the full dim (always a legal single block)."""
    t = min(target, dim)
    t = (t // align) * align
    while t >= align:
        if dim % t == 0:
            return t
        t -= align
    return dim


# ---------------------------------------------------------------------------
# K-tiled linear (GEMM + bias) kernel:  y = x @ W + b
# ---------------------------------------------------------------------------
def _linear_kernel(x_ref, w_ref, b_ref, o_ref, acc_ref):
    k = pl.program_id(2)

    @pl.when(k == 0)
    def _init():
        acc_ref[...] = jnp.zeros_like(acc_ref)

    # bf16 MXU operands, f32 accumulation (x may arrive f32 or bf16; w/b are bf16).
    acc_ref[...] += jnp.dot(x_ref[...].astype(jnp.bfloat16), w_ref[...],
                            preferred_element_type=jnp.float32)

    @pl.when(k == pl.num_programs(2) - 1)
    def _finalize():
        o_ref[...] = (acc_ref[...] + b_ref[...].astype(jnp.float32)).astype(o_ref.dtype)


def _linear(x2d, w, b, out_dtype, *, tm_target=256, tn_target=256, tk_target=512):
    """x2d: (M, K); w: (K, N) bf16; b: (1, N) bf16 -> (M, N) out_dtype."""
    M, K = x2d.shape
    _, N = w.shape
    tm = _pick_tile(M, tm_target, 8)
    tn = _pick_tile(N, tn_target, 128)
    tk = _pick_tile(K, tk_target, 128)

    flops = 2 * M * N * K
    bytes_accessed = (M * K * x2d.dtype.itemsize + K * N * w.dtype.itemsize
                      + N * b.dtype.itemsize + M * N * np.dtype(out_dtype).itemsize)

    return pl.pallas_call(
        _linear_kernel,
        out_shape=jax.ShapeDtypeStruct((M, N), out_dtype),
        grid_spec=pltpu.PrefetchScalarGridSpec(
            num_scalar_prefetch=0,
            grid=(M // tm, N // tn, K // tk),
            in_specs=[
                pl.BlockSpec((tm, tk), lambda i, j, k: (i, k)),   # activations
                pl.BlockSpec((tk, tn), lambda i, j, k: (k, j)),   # weights (bf16)
                pl.BlockSpec((1, tn), lambda i, j, k: (0, j)),    # bias (bf16)
            ],
            out_specs=pl.BlockSpec((tm, tn), lambda i, j, k: (i, j)),
            scratch_shapes=[pltpu.VMEM((tm, tn), jnp.float32)],   # f32 accumulator
        ),
        compiler_params=pltpu.CompilerParams(
            dimension_semantics=("parallel", "parallel", "arbitrary"),
            vmem_limit_bytes=_VMEM_LIMIT),
        cost_estimate=pl.CostEstimate(flops=flops, transcendentals=0,
                                      bytes_accessed=bytes_accessed),
    )(x2d, w, b)


# ---------------------------------------------------------------------------
# Flash-style causal attention with a lower-triangular (q_tile, kv_tile)
# schedule driven by scalar prefetch: grid = (B*H, nt*(nt+1)/2)
# ---------------------------------------------------------------------------
def _flash_attn_kernel(qs_ref, ks_ref, q_ref, k_ref, v_ref, o_ref,
                       m_sc, l_sc, acc_sc, *, tq, tkv):
    s = pl.program_id(1)
    qi = qs_ref[s]          # q-tile index for this schedule step
    ki = ks_ref[s]          # kv-tile index (always <= qi by construction)

    @pl.when(ki == 0)
    def _init():
        m_sc[...] = jnp.full(m_sc.shape, _NEG_INF, jnp.float32)
        l_sc[...] = jnp.zeros(l_sc.shape, jnp.float32)
        acc_sc[...] = jnp.zeros(acc_sc.shape, jnp.float32)

    def _block(apply_mask):
        # Softmax scale is already folded into q (via w_attn's q columns).
        q = q_ref[0]                                   # (tq, hd)  bf16
        k = k_ref[0]                                   # (tkv, hd) bf16
        sc = jnp.dot(q, k.T, preferred_element_type=jnp.float32)   # (tq, tkv) f32
        if apply_mask:                                 # diagonal tile only
            row = lax.broadcasted_iota(jnp.int32, sc.shape, 0) + qi * tq
            col = lax.broadcasted_iota(jnp.int32, sc.shape, 1) + ki * tkv
            sc = jnp.where(col <= row, sc, _NEG_INF)
        m_prev = m_sc[...]
        m_new = jnp.maximum(m_prev, jnp.max(sc, axis=-1, keepdims=True))
        alpha = jnp.exp(m_prev - m_new)
        p = jnp.exp(sc - m_new)
        l_sc[...] = alpha * l_sc[...] + jnp.sum(p, axis=-1, keepdims=True)
        acc_sc[...] = alpha * acc_sc[...] + jnp.dot(
            p.astype(v_ref.dtype), v_ref[0], preferred_element_type=jnp.float32)
        m_sc[...] = m_new

    # Strictly-below-diagonal kv tiles: no mask needed.
    @pl.when(ki < qi)
    def _unmasked():
        _block(apply_mask=False)

    # Diagonal kv tile: masked; it is the last contributing tile for this q tile,
    # so finalize here (deferred normalization, EUP approx reciprocal).
    @pl.when(ki == qi)
    def _diag_and_finalize():
        _block(apply_mask=True)
        inv_l = pl.reciprocal(l_sc[...], approx=True)
        o_ref[0] = (acc_sc[...] * inv_l).astype(o_ref.dtype)
    # Tiles with ki > qi never appear in the schedule -> no DMA, no grid step.


def _flash_attention(q, k, v, *, tile_target=256):
    """q, k, v: (B*H, T, hd) bf16 -> (B*H, T, hd) bf16."""
    BH, T, hd = q.shape
    t = _pick_tile(T, tile_target, 8)    # tq == tkv (required by diagonal-tile logic)
    nt = T // t
    n_steps = nt * (nt + 1) // 2

    # Lower-triangular schedule table (ki <= qi only), prefetched into SMEM.
    qs_list, ks_list = [], []
    for qi in range(nt):
        for ki in range(qi + 1):
            qs_list.append(qi)
            ks_list.append(ki)
    qs_sched = jnp.asarray(np.asarray(qs_list, np.int32))
    ks_sched = jnp.asarray(np.asarray(ks_list, np.int32))

    kernel = functools.partial(_flash_attn_kernel, tq=t, tkv=t)

    flops = 4 * BH * n_steps * t * t * hd            # q.k^T and p.v matmuls
    transcendentals = BH * n_steps * t * t           # exp
    bytes_accessed = (q.size + k.size + v.size + BH * T * hd) * q.dtype.itemsize

    # TODO(synk): for hd < 128 (e.g. GPT-2 hd=64), processing 2 heads per step would
    # make the output stores lane-dense (128 lanes) and better fill the MXU N dim.
    return pl.pallas_call(
        kernel,
        out_shape=jax.ShapeDtypeStruct((BH, T, hd), q.dtype),
        grid_spec=pltpu.PrefetchScalarGridSpec(
            num_scalar_prefetch=2,
            grid=(BH, n_steps),
            in_specs=[
                pl.BlockSpec((1, t, hd), lambda b, s, qs, ks: (b, qs[s], 0)),   # q
                pl.BlockSpec((1, t, hd), lambda b, s, qs, ks: (b, ks[s], 0)),   # k
                pl.BlockSpec((1, t, hd), lambda b, s, qs, ks: (b, ks[s], 0)),   # v
            ],
            out_specs=pl.BlockSpec((1, t, hd), lambda b, s, qs, ks: (b, qs[s], 0)),
            scratch_shapes=[
                pltpu.VMEM((t, 1), jnp.float32),     # running max   m
                pltpu.VMEM((t, 1), jnp.float32),     # running denom l
                pltpu.VMEM((t, hd), jnp.float32),    # unnormalized output acc
            ],
        ),
        compiler_params=pltpu.CompilerParams(
            dimension_semantics=("parallel", "arbitrary"),
            vmem_limit_bytes=_VMEM_LIMIT),
        cost_estimate=pl.CostEstimate(flops=flops, transcendentals=transcendentals,
                                      bytes_accessed=bytes_accessed),
    )(qs_sched, ks_sched, q, k, v)


# ---------------------------------------------------------------------------
# Full forward pass (matches CausalSelfAttention.forward, eval mode)
# ---------------------------------------------------------------------------
@functools.partial(jax.jit, static_argnames=("n_head",))
def causal_self_attention(x, w_attn, b_attn, w_proj, b_proj, *, n_head):
    """x: (B, T, C); w_attn: (C, 3C); b_attn: (1, 3C); w_proj: (C, C); b_proj: (1, C)."""
    B, T, C = x.shape
    hd = C // n_head
    sm_scale = 1.0 / math.sqrt(hd)

    # Fold the softmax scale into the q columns of the QKV projection (done once on
    # the weights, in f32, before the bf16 cast) and store all params as bf16 — the
    # kernels compute in bf16 on the MXU anyway, so f32 storage just doubles HBM bytes.
    col_scale = jnp.concatenate(
        [jnp.full((C,), sm_scale, jnp.float32), jnp.ones((2 * C,), jnp.float32)])
    w_attn_b = (w_attn * col_scale).astype(jnp.bfloat16)
    b_attn_b = (b_attn * col_scale).astype(jnp.bfloat16)
    w_proj_b = w_proj.astype(jnp.bfloat16)
    b_proj_b = b_proj.astype(jnp.bfloat16)

    # 1) QKV projection as one K-tiled GEMM over all B*T rows; bf16 output (halves the
    #    HBM traffic feeding attention).
    qkv = _linear(x.reshape(B * T, C), w_attn_b, b_attn_b, jnp.bfloat16)   # (B*T, 3C)

    # 2) Split + head layout (B*H, T, hd): lane-contiguous per head.
    # TODO(synk): these transposes are extra XLA HBM passes (bf16 now); eliminating them
    # via BlockSpec head-indexing needs (8,128)-legal head blocks and is left out.
    qkv = qkv.reshape(B, T, 3, n_head, hd)
    q = qkv[:, :, 0].transpose(0, 2, 1, 3).reshape(B * n_head, T, hd)
    k = qkv[:, :, 1].transpose(0, 2, 1, 3).reshape(B * n_head, T, hd)
    v = qkv[:, :, 2].transpose(0, 2, 1, 3).reshape(B * n_head, T, hd)

    # 3) Flash-style causal attention over the lower-triangular tile schedule.
    y = _flash_attention(q, k, v)                                          # (B*H, T, hd)

    # 4) Merge heads and apply the output projection (output back in x.dtype).
    y = y.reshape(B, n_head, T, hd).transpose(0, 2, 1, 3).reshape(B * T, C)
    out = _linear(y, w_proj_b, b_proj_b, x.dtype).reshape(B, T, C)
    # TODO(synk): attn_dropout / resid_dropout omitted (eval mode, p = 0).
    return out


# ---------------------------------------------------------------------------
# Pure-JAX reference
# ---------------------------------------------------------------------------
def _reference(x, w_attn, b_attn, w_proj, b_proj, n_head):
    B, T, C = x.shape
    hd = C // n_head
    qkv = jnp.einsum("btc,cd->btd", x, w_attn) + b_attn[0]
    q, k, v = jnp.split(qkv, 3, axis=-1)
    q = q.reshape(B, T, n_head, hd).transpose(0, 2, 1, 3)
    k = k.reshape(B, T, n_head, hd).transpose(0, 2, 1, 3)
    v = v.reshape(B, T, n_head, hd).transpose(0, 2, 1, 3)
    s = jnp.einsum("bhqd,bhkd->bhqk", q, k) / math.sqrt(hd)
    mask = jnp.tril(jnp.ones((T, T), dtype=bool))
    s = jnp.where(mask[None, None], s, -jnp.inf)
    p = jax.nn.softmax(s, axis=-1)
    y = jnp.einsum("bhqk,bhkd->bhqd", p, v)
    y = y.transpose(0, 2, 1, 3).reshape(B, T, C)
    return jnp.einsum("btc,cd->btd", y, w_proj) + b_proj[0]


if __name__ == "__main__":
    # Small config: n_embd=32, n_head=4, B=2, T=8 (dropout=0.0, bias=True).
    B, T, C, H = 2, 8, 32, 4

    key = jax.random.PRNGKey(0)
    kx, kw1, kb1, kw2, kb2 = jax.random.split(key, 5)
    x = jax.random.normal(kx, (B, T, C), dtype=jnp.float32)
    # c_attn: Linear(C, 3C) stored transposed as (C, 3C); c_proj: (C, C).
    w_attn = jax.random.normal(kw1, (C, 3 * C), dtype=jnp.float32) * 0.02
    b_attn = jax.random.normal(kb1, (1, 3 * C), dtype=jnp.float32) * 0.02
    w_proj = jax.random.normal(kw2, (C, C), dtype=jnp.float32) * 0.02
    b_proj = jax.random.normal(kb2, (1, C), dtype=jnp.float32) * 0.02

    out = causal_self_attention(x, w_attn, b_attn, w_proj, b_proj, n_head=H)
    out = jax.block_until_ready(out)

    ref = _reference(x, w_attn, b_attn, w_proj, b_proj, H)
    assert out.shape == (B, T, C)
    # bf16 params/activations + f32 accumulation + approx reciprocal -> bf16 tolerance.
    assert jnp.allclose(out, ref, atol=2e-2, rtol=2e-2), "mismatch vs JAX reference"

    print("KERNEL_OK")
</pallas_src>

<mosaic_0001>
module attributes {stable_mosaic.version = 11 : i64} {
  func.func @_linear_kernel(%arg0: i32, %arg1: i32, %arg2: i32, %arg3: memref<16x32xf32, #tpu.memory_space<vmem>>, %arg4: memref<32x96xbf16, #tpu.memory_space<vmem>>, %arg5: memref<1x96xbf16, #tpu.memory_space<vmem>>, %arg6: memref<16x96xbf16, #tpu.memory_space<vmem>>, %arg7: memref<16x96xf32, #tpu.memory_space<vmem>>) attributes {dimension_semantics = [#tpu.dimension_semantics<parallel>, #tpu.dimension_semantics<parallel>, #tpu.dimension_semantics<arbitrary>], iteration_bounds = array<i64: 1, 1, 1>, scalar_prefetch = 0 : i64, scratch_operands = 1 : i64, tpu.core_type = #tpu.core_type<tc>, window_params = [{transform_indices = @transform_0, window_bounds = array<i64: 16, 32>}, {transform_indices = @transform_1, window_bounds = array<i64: 32, 96>}, {transform_indices = @transform_2, window_bounds = array<i64: 1, 96>}, {transform_indices = @transform_3, window_bounds = array<i64: 16, 96>}]} {
    %c0_i32 = arith.constant 0 : i32
    %0 = arith.cmpi eq, %arg2, %c0_i32 : i32
    %1 = arith.extui %0 : i1 to i32
    %c0_i32_0 = arith.constant 0 : i32
    %2 = arith.cmpi ne, %1, %c0_i32_0 : i32
    scf.if %2 {
      %cst_10 = arith.constant 0.000000e+00 : f32
      %13 = vector.broadcast %cst_10 : f32 to vector<16x96xf32>
      %c0_11 = arith.constant 0 : index
      %c0_12 = arith.constant 0 : index
      %14 = vector.load %arg7[%c0_11, %c0_12] : memref<16x96xf32, #tpu.memory_space<vmem>>, vector<16x96xf32>
      tpu.vector_store %arg7[%c0_11, %c0_12], %13 {strides = array<i32>} : memref<16x96xf32, #tpu.memory_space<vmem>>, vector<16x96xf32>,
    } else {
    }
    %c0 = arith.constant 0 : index
    %c0_1 = arith.constant 0 : index
    %3 = vector.load %arg7[%c0, %c0_1] : memref<16x96xf32, #tpu.memory_space<vmem>>, vector<16x96xf32>
    %c0_2 = arith.constant 0 : index
    %c0_3 = arith.constant 0 : index
    %4 = vector.load %arg3[%c0_2, %c0_3] : memref<16x32xf32, #tpu.memory_space<vmem>>, vector<16x32xf32>
    %5 = arith.truncf %4 : vector<16x32xf32> to vector<16x32xbf16>
    %c0_4 = arith.constant 0 : index
    %c0_5 = arith.constant 0 : index
    %6 = vector.load %arg4[%c0_4, %c0_5] : memref<32x96xbf16, #tpu.memory_space<vmem>>, vector<32x96xbf16>
    %cst = arith.constant dense<0.000000e+00> : vector<16x96xf32>
    %7 = tpu.matmul %5, %6, %cst {dimension_numbers = #tpu.dot_dimension_numbers<[1], [0], [0], [1], [0, 0, 1, 1], [], []>} : vector<16x32xbf16>, vector<32x96xbf16>, vector<16x96xf32> -> vector<16x96xf32>
    %8 = arith.addf %3, %7 : vector<16x96xf32>
    %c0_6 = arith.constant 0 : index
    %c0_7 = arith.constant 0 : index
    %9 = vector.load %arg7[%c0_6, %c0_7] : memref<16x96xf32, #tpu.memory_space<vmem>>, vector<16x96xf32>
    tpu.vector_store %arg7[%c0_6, %c0_7], %8 {strides = array<i32>} : memref<16x96xf32, #tpu.memory_space<vmem>>, vector<16x96xf32>,
    %c0_i32_8 = arith.constant 0 : i32
    %10 = arith.cmpi eq, %arg2, %c0_i32_8 : i32
    %11 = arith.extui %10 : i1 to i32
    %c0_i32_9 = arith.constant 0 : i32
    %12 = arith.cmpi ne, %11, %c0_i32_9 : i32
    scf.if %12 {
      %c0_10 = arith.constant 0 : index
      %c0_11 = arith.constant 0 : index
      %13 = vector.load %arg7[%c0_10, %c0_11] : memref<16x96xf32, #tpu.memory_space<vmem>>, vector<16x96xf32>
      %c0_12 = arith.constant 0 : index
      %c0_13 = arith.constant 0 : index
      %14 = vector.load %arg5[%c0_12, %c0_13] : memref<1x96xbf16, #tpu.memory_space<vmem>>, vector<1x96xbf16>
      %15 = arith.extf %14 : vector<1x96xbf16> to vector<1x96xf32>
      %16 = vector.broadcast %15 : vector<1x96xf32> to vector<16x96xf32>
      %17 = arith.addf %13, %16 : vector<16x96xf32>
      %18 = arith.truncf %17 : vector<16x96xf32> to vector<16x96xbf16>
      %c0_14 = arith.constant 0 : index
      %c0_15 = arith.constant 0 : index
      %19 = vector.load %arg6[%c0_14, %c0_15] : memref<16x96xbf16, #tpu.memory_space<vmem>>, vector<16x96xbf16>
      tpu.vector_store %arg6[%c0_14, %c0_15], %18 {strides = array<i32>} : memref<16x96xbf16, #tpu.memory_space<vmem>>, vector<16x96xbf16>,
    } else {
    }
    return
  }
  func.func @transform_0(%arg0: i32, %arg1: i32, %arg2: i32) -> (i32, i32) {
    %c0_i32 = arith.constant 0 : i32
    return %arg0, %arg2 : i32, i32
  }
  func.func @transform_1(%arg0: i32, %arg1: i32, %arg2: i32) -> (i32, i32) {
    %c0_i32 = arith.constant 0 : i32
    return %arg2, %arg1 : i32, i32
  }
  func.func @transform_2(%arg0: i32, %arg1: i32, %arg2: i32) -> (i32, i32) {
    %c0_i32 = arith.constant 0 : i32
    %c0_i32_0 = arith.constant 0 : i32
    return %c0_i32, %arg1 : i32, i32
  }
  func.func @transform_3(%arg0: i32, %arg1: i32, %arg2: i32) -> (i32, i32) {
    %c0_i32 = arith.constant 0 : i32
    return %arg0, %arg1 : i32, i32
  }
}

module attributes {stable_mosaic.version = 11 : i64} {
  func.func @_flash_attn_kernel(%arg0: i32, %arg1: i32, %arg2: memref<1xi32, #tpu.memory_space<smem>>, %arg3: memref<1xi32, #tpu.memory_space<smem>>, %arg4: memref<1x8x8xbf16, #tpu.memory_space<vmem>>, %arg5: memref<1x8x8xbf16, #tpu.memory_space<vmem>>, %arg6: memref<1x8x8xbf16, #tpu.memory_space<vmem>>, %arg7: memref<1x8x8xbf16, #tpu.memory_space<vmem>>, %arg8: memref<8x1xf32, #tpu.memory_space<vmem>>, %arg9: memref<8x1xf32, #tpu.memory_space<vmem>>, %arg10: memref<8x8xf32, #tpu.memory_space<vmem>>) attributes {dimension_semantics = [#tpu.dimension_semantics<parallel>, #tpu.dimension_semantics<arbitrary>], iteration_bounds = array<i64: 8, 1>, scalar_prefetch = 2 : i64, scratch_operands = 3 : i64, tpu.core_type = #tpu.core_type<tc>, window_params = [{transform_indices = @transform_0, window_bounds = array<i64: 1, 8, 8>}, {transform_indices = @transform_1, window_bounds = array<i64: 1, 8, 8>}, {transform_indices = @transform_2, window_bounds = array<i64: 1, 8, 8>}, {transform_indices = @transform_3, window_bounds = array<i64: 1, 8, 8>}]} {
    %0 = arith.index_cast %arg1 : i32 to index
    %1 = memref.load %arg2[%0] : memref<1xi32, #tpu.memory_space<smem>>
    %2 = arith.index_cast %arg1 : i32 to index
    %3 = memref.load %arg3[%2] : memref<1xi32, #tpu.memory_space<smem>>
    %c0_i32 = arith.constant 0 : i32
    %4 = arith.cmpi eq, %3, %c0_i32 : i32
    %5 = arith.extui %4 : i1 to i32
    %c0_i32_0 = arith.constant 0 : i32
    %6 = arith.cmpi ne, %5, %c0_i32_0 : i32
    scf.if %6 {
      %cst = arith.constant -1.000000e+30 : f32
      %13 = vector.broadcast %cst : f32 to vector<8x1xf32>
      %c0 = arith.constant 0 : index
      %c0_3 = arith.constant 0 : index
      %14 = vector.load %arg8[%c0, %c0_3] : memref<8x1xf32, #tpu.memory_space<vmem>>, vector<8x1xf32>
      tpu.vector_store %arg8[%c0, %c0_3], %13 {strides = array<i32>} : memref<8x1xf32, #tpu.memory_space<vmem>>, vector<8x1xf32>,
      %cst_4 = arith.constant 0.000000e+00 : f32
      %15 = vector.broadcast %cst_4 : f32 to vector<8x1xf32>
      %c0_5 = arith.constant 0 : index
      %c0_6 = arith.constant 0 : index
      %16 = vector.load %arg9[%c0_5, %c0_6] : memref<8x1xf32, #tpu.memory_space<vmem>>, vector<8x1xf32>
      tpu.vector_store %arg9[%c0_5, %c0_6], %15 {strides = array<i32>} : memref<8x1xf32, #tpu.memory_space<vmem>>, vector<8x1xf32>,
      %cst_7 = arith.constant 0.000000e+00 : f32
      %17 = vector.broadcast %cst_7 : f32 to vector<8x8xf32>
      %c0_8 = arith.constant 0 : index
      %c0_9 = arith.constant 0 : index
      %18 = vector.load %arg10[%c0_8, %c0_9] : memref<8x8xf32, #tpu.memory_space<vmem>>, vector<8x8xf32>
      tpu.vector_store %arg10[%c0_8, %c0_9], %17 {strides = array<i32>} : memref<8x8xf32, #tpu.memory_space<vmem>>, vector<8x8xf32>,
    } else {
    }
    %7 = arith.cmpi slt, %3, %1 : i32
    %8 = arith.extui %7 : i1 to i32
    %c0_i32_1 = arith.constant 0 : i32
    %9 = arith.cmpi ne, %8, %c0_i32_1 : i32
    scf.if %9 {
      %c0 = arith.constant 0 : index
      %c0_3 = arith.constant 0 : index
      %c0_4 = arith.constant 0 : index
      %13 = vector.load %arg4[%c0, %c0_3, %c0_4] : memref<1x8x8xbf16, #tpu.memory_space<vmem>>, vector<1x8x8xbf16>
      %14 = vector.shape_cast %13 : vector<1x8x8xbf16> to vector<8x8xbf16>
      %c0_5 = arith.constant 0 : index
      %c0_6 = arith.constant 0 : index
      %c0_7 = arith.constant 0 : index
      %15 = vector.load %arg5[%c0_5, %c0_6, %c0_7] : memref<1x8x8xbf16, #tpu.memory_space<vmem>>, vector<1x8x8xbf16>
      %16 = vector.shape_cast %15 : vector<1x8x8xbf16> to vector<8x8xbf16>
      %17 = tpu.transpose %16, [1, 0] : vector<8x8xbf16> -> vector<8x8xbf16>
      %cst = arith.constant dense<0.000000e+00> : vector<8x8xf32>
      %18 = tpu.matmul %14, %17, %cst {dimension_numbers = #tpu.dot_dimension_numbers<[1], [0], [0], [1], [0, 0, 1, 1], [], []>} : vector<8x8xbf16>, vector<8x8xbf16>, vector<8x8xf32> -> vector<8x8xf32>
      %c0_8 = arith.constant 0 : index
      %c0_9 = arith.constant 0 : index
      %19 = vector.load %arg8[%c0_8, %c0_9] : memref<8x1xf32, #tpu.memory_space<vmem>>, vector<8x1xf32>
      %cst_10 = arith.constant dense<0xFF800000> : vector<8xf32>
      %20 = vector.multi_reduction <maximumf>, %18, %cst_10 [1] : vector<8x8xf32> to vector<8xf32>
      %21 = vector.shape_cast %20 : vector<8xf32> to vector<8x1xf32>
      %22 = arith.maximumf %19, %21 : vector<8x1xf32>
      %23 = arith.subf %19, %22 : vector<8x1xf32>
      %24 = math.exp %23 : vector<8x1xf32>
      %25 = vector.broadcast %22 : vector<8x1xf32> to vector<8x8xf32>
      %26 = arith.subf %18, %25 : vector<8x8xf32>
      %27 = math.exp %26 : vector<8x8xf32>
      %c0_11 = arith.constant 0 : index
      %c0_12 = arith.constant 0 : index
      %28 = vector.load %arg9[%c0_11, %c0_12] : memref<8x1xf32, #tpu.memory_space<vmem>>, vector<8x1xf32>
      %29 = arith.mulf %24, %28 : vector<8x1xf32>
      %cst_13 = arith.constant dense<0.000000e+00> : vector<8xf32>
      %30 = vector.multi_reduction <add>, %27, %cst_13 [1] : vector<8x8xf32> to vector<8xf32>
      %31 = vector.shape_cast %30 : vector<8xf32> to vector<8x1xf32>
      %32 = arith.addf %29, %31 : vector<8x1xf32>
      %c0_14 = arith.constant 0 : index
      %c0_15 = arith.constant 0 : index
      %33 = vector.load %arg9[%c0_14, %c0_15] : memref<8x1xf32, #tpu.memory_space<vmem>>, vector<8x1xf32>
      tpu.vector_store %arg9[%c0_14, %c0_15], %32 {strides = array<i32>} : memref<8x1xf32, #tpu.memory_space<vmem>>, vector<8x1xf32>,
      %c0_16 = arith.constant 0 : index
      %c0_17 = arith.constant 0 : index
      %34 = vector.load %arg10[%c0_16, %c0_17] : memref<8x8xf32, #tpu.memory_space<vmem>>, vector<8x8xf32>
      %35 = vector.broadcast %24 : vector<8x1xf32> to vector<8x8xf32>
      %36 = arith.mulf %35, %34 : vector<8x8xf32>
      %37 = arith.truncf %27 : vector<8x8xf32> to vector<8x8xbf16>
      %c0_18 = arith.constant 0 : index
      %c0_19 = arith.constant 0 : index
      %c0_20 = arith.constant 0 : index
      %38 = vector.load %arg6[%c0_18, %c0_19, %c0_20] : memref<1x8x8xbf16, #tpu.memory_space<vmem>>, vector<1x8x8xbf16>
      %39 = vector.shape_cast %38 : vector<1x8x8xbf16> to vector<8x8xbf16>
      %cst_21 = arith.constant dense<0.000000e+00> : vector<8x8xf32>
      %40 = tpu.matmul %37, %39, %cst_21 {dimension_numbers = #tpu.dot_dimension_numbers<[1], [0], [0], [1], [0, 0, 1, 1], [], []>} : vector<8x8xbf16>, vector<8x8xbf16>, vector<8x8xf32> -> vector<8x8xf32>
      %41 = arith.addf %36, %40 : vector<8x8xf32>
      %c0_22 = arith.constant 0 : index
      %c0_23 = arith.constant 0 : index
      %42 = vector.load %arg10[%c0_22, %c0_23] : memref<8x8xf32, #tpu.memory_space<vmem>>, vector<8x8xf32>
      tpu.vector_store %arg10[%c0_22, %c0_23], %41 {strides = array<i32>} : memref<8x8xf32, #tpu.memory_space<vmem>>, vector<8x8xf32>,
      %c0_24 = arith.constant 0 : index
      %c0_25 = arith.constant 0 : index
      %43 = vector.load %arg8[%c0_24, %c0_25] : memref<8x1xf32, #tpu.memory_space<vmem>>, vector<8x1xf32>
      tpu.vector_store %arg8[%c0_24, %c0_25], %22 {strides = array<i32>} : memref<8x1xf32, #tpu.memory_space<vmem>>, vector<8x1xf32>,
    } else {
    }
    %10 = arith.cmpi eq, %3, %1 : i32
    %11 = arith.extui %10 : i1 to i32
    %c0_i32_2 = arith.constant 0 : i32
    %12 = arith.cmpi ne, %11, %c0_i32_2 : i32
    scf.if %12 {
      %c0 = arith.constant 0 : index
      %c0_3 = arith.constant 0 : index
      %c0_4 = arith.constant 0 : index
      %13 = vector.load %arg4[%c0, %c0_3, %c0_4] : memref<1x8x8xbf16, #tpu.memory_space<vmem>>, vector<1x8x8xbf16>
      %14 = vector.shape_cast %13 : vector<1x8x8xbf16> to vector<8x8xbf16>
      %c0_5 = arith.constant 0 : index
      %c0_6 = arith.constant 0 : index
      %c0_7 = arith.constant 0 : index
      %15 = vector.load %arg5[%c0_5, %c0_6, %c0_7] : memref<1x8x8xbf16, #tpu.memory_space<vmem>>, vector<1x8x8xbf16>
      %16 = vector.shape_cast %15 : vector<1x8x8xbf16> to vector<8x8xbf16>
      %17 = tpu.transpose %16, [1, 0] : vector<8x8xbf16> -> vector<8x8xbf16>
      %cst = arith.constant dense<0.000000e+00> : vector<8x8xf32>
      %18 = tpu.matmul %14, %17, %cst {dimension_numbers = #tpu.dot_dimension_numbers<[1], [0], [0], [1], [0, 0, 1, 1], [], []>} : vector<8x8xbf16>, vector<8x8xbf16>, vector<8x8xf32> -> vector<8x8xf32>
      %19 = tpu.iota {dimensions = array<i32: 0>} : vector<8x8xi32>
      %c8_i32 = arith.constant 8 : i32
      %20 = arith.muli %1, %c8_i32 : i32
      %21 = vector.broadcast %20 : i32 to vector<8x8xi32>
      %22 = arith.addi %19, %21 : vector<8x8xi32>
      %23 = tpu.iota {dimensions = array<i32: 1>} : vector<8x8xi32>
      %c8_i32_8 = arith.constant 8 : i32
      %24 = arith.muli %3, %c8_i32_8 : i32
      %25 = vector.broadcast %24 : i32 to vector<8x8xi32>
      %26 = arith.addi %23, %25 : vector<8x8xi32>
      %27 = arith.cmpi sle, %26, %22 : vector<8x8xi32>
      %cst_9 = arith.constant -1.000000e+30 : f32
      %28 = vector.broadcast %cst_9 : f32 to vector<8x8xf32>
      %29 = arith.select %27, %18, %28 : vector<8x8xi1>, vector<8x8xf32>
      %c0_10 = arith.constant 0 : index
      %c0_11 = arith.constant 0 : index
      %30 = vector.load %arg8[%c0_10, %c0_11] : memref<8x1xf32, #tpu.memory_space<vmem>>, vector<8x1xf32>
      %cst_12 = arith.constant dense<0xFF800000> : vector<8xf32>
      %31 = vector.multi_reduction <maximumf>, %29, %cst_12 [1] : vector<8x8xf32> to vector<8xf32>
      %32 = vector.shape_cast %31 : vector<8xf32> to vector<8x1xf32>
      %33 = arith.maximumf %30, %32 : vector<8x1xf32>
      %34 = arith.subf %30, %33 : vector<8x1xf32>
      %35 = math.exp %34 : vector<8x1xf32>
      %36 = vector.broadcast %33 : vector<8x1xf32> to vector<8x8xf32>
      %37 = arith.subf %29, %36 : vector<8x8xf32>
      %38 = math.exp %37 : vector<8x8xf32>
      %c0_13 = arith.constant 0 : index
      %c0_14 = arith.constant 0 : index
      %39 = vector.load %arg9[%c0_13, %c0_14] : memref<8x1xf32, #tpu.memory_space<vmem>>, vector<8x1xf32>
      %40 = arith.mulf %35, %39 : vector<8x1xf32>
      %cst_15 = arith.constant dense<0.000000e+00> : vector<8xf32>
      %41 = vector.multi_reduction <add>, %38, %cst_15 [1] : vector<8x8xf32> to vector<8xf32>
      %42 = vector.shape_cast %41 : vector<8xf32> to vector<8x1xf32>
      %43 = arith.addf %40, %42 : vector<8x1xf32>
      %c0_16 = arith.constant 0 : index
      %c0_17 = arith.constant 0 : index
      %44 = vector.load %arg9[%c0_16, %c0_17] : memref<8x1xf32, #tpu.memory_space<vmem>>, vector<8x1xf32>
      tpu.vector_store %arg9[%c0_16, %c0_17], %43 {strides = array<i32>} : memref<8x1xf32, #tpu.memory_space<vmem>>, vector<8x1xf32>,
      %c0_18 = arith.constant 0 : index
      %c0_19 = arith.constant 0 : index
      %45 = vector.load %arg10[%c0_18, %c0_19] : memref<8x8xf32, #tpu.memory_space<vmem>>, vector<8x8xf32>
      %46 = vector.broadcast %35 : vector<8x1xf32> to vector<8x8xf32>
      %47 = arith.mulf %46, %45 : vector<8x8xf32>
      %48 = arith.truncf %38 : vector<8x8xf32> to vector<8x8xbf16>
      %c0_20 = arith.constant 0 : index
      %c0_21 = arith.constant 0 : index
      %c0_22 = arith.constant 0 : index
      %49 = vector.load %arg6[%c0_20, %c0_21, %c0_22] : memref<1x8x8xbf16, #tpu.memory_space<vmem>>, vector<1x8x8xbf16>
      %50 = vector.shape_cast %49 : vector<1x8x8xbf16> to vector<8x8xbf16>
      %cst_23 = arith.constant dense<0.000000e+00> : vector<8x8xf32>
      %51 = tpu.matmul %48, %50, %cst_23 {dimension_numbers = #tpu.dot_dimension_numbers<[1], [0], [0], [1], [0, 0, 1, 1], [], []>} : vector<8x8xbf16>, vector<8x8xbf16>, vector<8x8xf32> -> vector<8x8xf32>
      %52 = arith.addf %47, %51 : vector<8x8xf32>
      %c0_24 = arith.constant 0 : index
      %c0_25 = arith.constant 0 : index
      %53 = vector.load %arg10[%c0_24, %c0_25] : memref<8x8xf32, #tpu.memory_space<vmem>>, vector<8x8xf32>
      tpu.vector_store %arg10[%c0_24, %c0_25], %52 {strides = array<i32>} : memref<8x8xf32, #tpu.memory_space<vmem>>, vector<8x8xf32>,
      %c0_26 = arith.constant 0 : index
      %c0_27 = arith.constant 0 : index
      %54 = vector.load %arg8[%c0_26, %c0_27] : memref<8x1xf32, #tpu.memory_space<vmem>>, vector<8x1xf32>
      tpu.vector_store %arg8[%c0_26, %c0_27], %33 {strides = array<i32>} : memref<8x1xf32, #tpu.memory_space<vmem>>, vector<8x1xf32>,
      %c0_28 = arith.constant 0 : index
      %c0_29 = arith.constant 0 : index
      %55 = vector.load %arg9[%c0_28, %c0_29] : memref<8x1xf32, #tpu.memory_space<vmem>>, vector<8x1xf32>
      %56 = tpu.reciprocal %55 {approx = true} : vector<8x1xf32> -> vector<8x1xf32>
      %c0_30 = arith.constant 0 : index
      %c0_31 = arith.constant 0 : index
      %57 = vector.load %arg10[%c0_30, %c0_31] : memref<8x8xf32, #tpu.memory_space<vmem>>, vector<8x8xf32>
      %58 = vector.broadcast %56 : vector<8x1xf32> to vector<8x8xf32>
      %59 = arith.mulf %57, %58 : vector<8x8xf32>
      %60 = arith.truncf %59 : vector<8x8xf32> to vector<8x8xbf16>
      %c0_32 = arith.constant 0 : index
      %c0_33 = arith.constant 0 : index
      %c0_34 = arith.constant 0 : index
      %61 = vector.load %arg7[%c0_32, %c0_33, %c0_34] : memref<1x8x8xbf16, #tpu.memory_space<vmem>>, vector<1x8x8xbf16>
      %62 = vector.shape_cast %61 : vector<1x8x8xbf16> to vector<8x8xbf16>
      %63 = vector.shape_cast %60 : vector<8x8xbf16> to vector<1x8x8xbf16>
      tpu.vector_store %arg7[%c0_32, %c0_33, %c0_34], %63 {strides = array<i32>} : memref<1x8x8xbf16, #tpu.memory_space<vmem>>, vector<1x8x8xbf16>,
    } else {
    }
    return
  }
  func.func @transform_0(%arg0: i32, %arg1: i32, %arg2: memref<1xi32, #tpu.memory_space<smem>>, %arg3: memref<1xi32, #tpu.memory_space<smem>>) -> (i32, i32, i32) {
    %0 = arith.index_cast %arg1 : i32 to index
    %1 = memref.load %arg2[%0] : memref<1xi32, #tpu.memory_space<smem>>
    %c0_i32 = arith.constant 0 : i32
    %c0_i32_0 = arith.constant 0 : i32
    return %arg0, %1, %c0_i32 : i32, i32, i32
  }
  func.func @transform_1(%arg0: i32, %arg1: i32, %arg2: memref<1xi32, #tpu.memory_space<smem>>, %arg3: memref<1xi32, #tpu.memory_space<smem>>) -> (i32, i32, i32) {
    %0 = arith.index_cast %arg1 : i32 to index
    %1 = memref.load %arg3[%0] : memref<1xi32, #tpu.memory_space<smem>>
    %c0_i32 = arith.constant 0 : i32
    %c0_i32_0 = arith.constant 0 : i32
    return %arg0, %1, %c0_i32 : i32, i32, i32
  }
  func.func @transform_2(%arg0: i32, %arg1: i32, %arg2: memref<1xi32, #tpu.memory_space<smem>>, %arg3: memref<1xi32, #tpu.memory_space<smem>>) -> (i32, i32, i32) {
    %0 = arith.index_cast %arg1 : i32 to index
    %1 = memref.load %arg3[%0] : memref<1xi32, #tpu.memory_space<smem>>
    %c0_i32 = arith.constant 0 : i32
    %c0_i32_0 = arith.constant 0 : i32
    return %arg0, %1, %c0_i32 : i32, i32, i32
  }
  func.func @transform_3(%arg0: i32, %arg1: i32, %arg2: memref<1xi32, #tpu.memory_space<smem>>, %arg3: memref<1xi32, #tpu.memory_space<smem>>) -> (i32, i32, i32) {
    %0 = arith.index_cast %arg1 : i32 to index
    %1 = memref.load %arg2[%0] : memref<1xi32, #tpu.memory_space<smem>>
    %c0_i32 = arith.constant 0 : i32
    %c0_i32_0 = arith.constant 0 : i32
    return %arg0, %1, %c0_i32 : i32, i32, i32
  }
}

module attributes {stable_mosaic.version = 11 : i64} {
  func.func @_linear_kernel(%arg0: i32, %arg1: i32, %arg2: i32, %arg3: memref<16x32xbf16, #tpu.memory_space<vmem>>, %arg4: memref<32x32xbf16, #tpu.memory_space<vmem>>, %arg5: memref<1x32xbf16, #tpu.memory_space<vmem>>, %arg6: memref<16x32xf32, #tpu.memory_space<vmem>>, %arg7: memref<16x32xf32, #tpu.memory_space<vmem>>) attributes {dimension_semantics = [#tpu.dimension_semantics<parallel>, #tpu.dimension_semantics<parallel>, #tpu.dimension_semantics<arbitrary>], iteration_bounds = array<i64: 1, 1, 1>, scalar_prefetch = 0 : i64, scratch_operands = 1 : i64, tpu.core_type = #tpu.core_type<tc>, window_params = [{transform_indices = @transform_0, window_bounds = array<i64: 16, 32>}, {transform_indices = @transform_1, window_bounds = array<i64: 32, 32>}, {transform_indices = @transform_2, window_bounds = array<i64: 1, 32>}, {transform_indices = @transform_3, window_bounds = array<i64: 16, 32>}]} {
    %c0_i32 = arith.constant 0 : i32
    %0 = arith.cmpi eq, %arg2, %c0_i32 : i32
    %1 = arith.extui %0 : i1 to i32
    %c0_i32_0 = arith.constant 0 : i32
    %2 = arith.cmpi ne, %1, %c0_i32_0 : i32
    scf.if %2 {
      %cst_10 = arith.constant 0.000000e+00 : f32
      %12 = vector.broadcast %cst_10 : f32 to vector<16x32xf32>
      %c0_11 = arith.constant 0 : index
      %c0_12 = arith.constant 0 : index
      %13 = vector.load %arg7[%c0_11, %c0_12] : memref<16x32xf32, #tpu.memory_space<vmem>>, vector<16x32xf32>
      tpu.vector_store %arg7[%c0_11, %c0_12], %12 {strides = array<i32>} : memref<16x32xf32, #tpu.memory_space<vmem>>, vector<16x32xf32>,
    } else {
    }
    %c0 = arith.constant 0 : index
    %c0_1 = arith.constant 0 : index
    %3 = vector.load %arg7[%c0, %c0_1] : memref<16x32xf32, #tpu.memory_space<vmem>>, vector<16x32xf32>
    %c0_2 = arith.constant 0 : index
    %c0_3 = arith.constant 0 : index
    %4 = vector.load %arg3[%c0_2, %c0_3] : memref<16x32xbf16, #tpu.memory_space<vmem>>, vector<16x32xbf16>
    %c0_4 = arith.constant 0 : index
    %c0_5 = arith.constant 0 : index
    %5 = vector.load %arg4[%c0_4, %c0_5] : memref<32x32xbf16, #tpu.memory_space<vmem>>, vector<32x32xbf16>
    %cst = arith.constant dense<0.000000e+00> : vector<16x32xf32>
    %6 = tpu.matmul %4, %5, %cst {dimension_numbers = #tpu.dot_dimension_numbers<[1], [0], [0], [1], [0, 0, 1, 1], [], []>} : vector<16x32xbf16>, vector<32x32xbf16>, vector<16x32xf32> -> vector<16x32xf32>
    %7 = arith.addf %3, %6 : vector<16x32xf32>
    %c0_6 = arith.constant 0 : index
    %c0_7 = arith.constant 0 : index
    %8 = vector.load %arg7[%c0_6, %c0_7] : memref<16x32xf32, #tpu.memory_space<vmem>>, vector<16x32xf32>
    tpu.vector_store %arg7[%c0_6, %c0_7], %7 {strides = array<i32>} : memref<16x32xf32, #tpu.memory_space<vmem>>, vector<16x32xf32>,
    %c0_i32_8 = arith.constant 0 : i32
    %9 = arith.cmpi eq, %arg2, %c0_i32_8 : i32
    %10 = arith.extui %9 : i1 to i32
    %c0_i32_9 = arith.constant 0 : i32
    %11 = arith.cmpi ne, %10, %c0_i32_9 : i32
    scf.if %11 {
      %c0_10 = arith.constant 0 : index
      %c0_11 = arith.constant 0 : index
      %12 = vector.load %arg7[%c0_10, %c0_11] : memref<16x32xf32, #tpu.memory_space<vmem>>, vector<16x32xf32>
      %c0_12 = arith.constant 0 : index
      %c0_13 = arith.constant 0 : index
      %13 = vector.load %arg5[%c0_12, %c0_13] : memref<1x32xbf16, #tpu.memory_space<vmem>>, vector<1x32xbf16>
      %14 = arith.extf %13 : vector<1x32xbf16> to vector<1x32xf32>
      %15 = vector.broadcast %14 : vector<1x32xf32> to vector<16x32xf32>
      %16 = arith.addf %12, %15 : vector<16x32xf32>
      %c0_14 = arith.constant 0 : index
      %c0_15 = arith.constant 0 : index
      %17 = vector.load %arg6[%c0_14, %c0_15] : memref<16x32xf32, #tpu.memory_space<vmem>>, vector<16x32xf32>
      tpu.vector_store %arg6[%c0_14, %c0_15], %16 {strides = array<i32>} : memref<16x32xf32, #tpu.memory_space<vmem>>, vector<16x32xf32>,
    } else {
    }
    return
  }
  func.func @transform_0(%arg0: i32, %arg1: i32, %arg2: i32) -> (i32, i32) {
    %c0_i32 = arith.constant 0 : i32
    return %arg0, %arg2 : i32, i32
  }
  func.func @transform_1(%arg0: i32, %arg1: i32, %arg2: i32) -> (i32, i32) {
    %c0_i32 = arith.constant 0 : i32
    return %arg2, %arg1 : i32, i32
  }
  func.func @transform_2(%arg0: i32, %arg1: i32, %arg2: i32) -> (i32, i32) {
    %c0_i32 = arith.constant 0 : i32
    %c0_i32_0 = arith.constant 0 : i32
    return %c0_i32, %arg1 : i32, i32
  }
  func.func @transform_3(%arg0: i32, %arg1: i32, %arg2: i32) -> (i32, i32) {
    %c0_i32 = arith.constant 0 : i32
    return %arg0, %arg1 : i32, i32
  }
}

</mosaic_0001>

<llo_original>
// kernel: causal_self_attention.3
$region0: #{causal_self_attention.3}
  #allocation0 [shape = 'u32[]', space=smem, size = 0x4, offset = 0x4, fixed_abs, tag = 'smem constant byte address 0x4 - core index']
  #allocation1 [shape = 'u32[144,128]{1,0:T(1,128)}', space=vmem, size = 0x12000, scoped, tag = 'internal scratch']
  #allocation2 [shape = 'f32[16,96]{1,0:T(8,128)}', space=vmem, size = 0x2000, scoped, tag = 'scratch operand']
  %s0 = inlined_call_operand.hbm [shape: f32[16,32], index: 0, kind: input, shape index: {}]
  %s1 = inlined_call_operand.hbm [shape: bf16[32,96], index: 1, kind: input, shape index: {}]
  %s2 = inlined_call_operand.hbm [shape: bf16[1,96], index: 2, kind: input, shape index: {}]
  %s3 = inlined_call_operand.hbm [shape: bf16[16,96], index: 3, kind: output, shape index: {}]
  %s4 = sld [smem:[#allocation0]]
  $region42: #{causal_self_attention.3} parent=0
    _
  %s6 = ssub.s32 1, %s4
  %s7 = scalar_select 0, %s6, %s4
  $region1: #{causal_self_attention.3} parent=0
    #allocation3 [shape = 'u8[8192]{0}', space=vmem, size = 0x2000, scoped, tag = 'input window, operand 0, single buffered']
    #allocation4 [shape = 's32[1]{0}', space=sflag, size = 0x4, scoped, tag = 'scoped memory for causal_self_attention.3']
    #allocation5 [shape = 's32[1]{0}', space=sflag, size = 0x4, scoped, tag = 'scoped memory for causal_self_attention.3']
    #allocation6 [shape = 'u8[8192]{0}', space=vmem, size = 0x2000, scoped, tag = 'input window, operand 1, single buffered']
    #allocation7 [shape = 's32[1]{0}', space=sflag, size = 0x4, scoped, tag = 'scoped memory for causal_self_attention.3']
    #allocation8 [shape = 'u8[512]{0}', space=vmem, size = 0x400, scoped, tag = 'input window, operand 2, single buffered']
    #allocation9 [shape = 'u8[4096]{0}', space=vmem, size = 0x1000, scoped, tag = 'output window, operand 0, single buffered']
    %8 = vsyncpa [#allocation4], 0
    %9 = vsyncpa [#allocation7], 0
    %10 = vsyncpa [#allocation5], 0
    // Predicated region
    $region2: #{causal_self_attention.3} parent=1 // pred_check
      _
    $region3: #{causal_self_attention.3} parent=1 // pred_check_branch
      %12 = sbr.rel (0) target = $region5
    $region4: #{causal_self_attention.3} parent=1 // pred_region
      %s14 = ssub.s32 256, 256
      %15 = vsyncadd [#allocation4], %s14
      %s16 = sshll.u32 [#allocation3], 4
      %s17 = int_to_ptr.vmem [resolvable:$true] %s16
      %22 = dma.hbm_to_vmem [thread:$0]  %s0, 256, %s17, [#allocation4], 128, 128, 8
    $region5: #{causal_self_attention.3} parent=1 // pred_fallthru
      _
    // Predicated region
    $region6: #{causal_self_attention.3} parent=1 // pred_check
      _
    $region7: #{causal_self_attention.3} parent=1 // pred_check_branch
      %24 = sbr.rel (0) target = $region9
    $region8: #{causal_self_attention.3} parent=1 // pred_region
      %s26 = ssub.s32 256, 256
      %27 = vsyncadd [#allocation7], %s26
      %s28 = sshll.u32 [#allocation6], 4
      %s29 = int_to_ptr.vmem [resolvable:$true] %s28
      %34 = dma.hbm_to_vmem [thread:$0]  %s1, 256, %s29, [#allocation7], 64, 64, 4
    $region9: #{causal_self_attention.3} parent=1 // pred_fallthru
      _
    // Predicated region
    $region10: #{causal_self_attention.3} parent=1 // pred_check
      _
    $region11: #{causal_self_attention.3} parent=1 // pred_check_branch
      %36 = sbr.rel (0) target = $region13
    $region12: #{causal_self_attention.3} parent=1 // pred_region
      %s38 = ssub.s32 16, 16
      %39 = vsyncadd [#allocation7], %s38
      %s41 = sshll.u32 [#allocation8], 4
      %s42 = int_to_ptr.vmem [resolvable:$true] %s41
      %44 = dma.hbm_to_vmem [thread:$0]  %s2, 16, %s42, [#allocation7]
    $region13: #{causal_self_attention.3} parent=1 // pred_fallthru
      _
    // Predicated region
    $region14: #{causal_self_attention.3} parent=1 // pred_check
      _
    $region15: #{causal_self_attention.3} parent=1 // pred_check_branch
      %46 = sbr.rel (0) target = $region17
    $region16: #{causal_self_attention.3} parent=1 // pred_region
      %47 = dma.done [#allocation4], 256
    $region17: #{causal_self_attention.3} parent=1 // pred_fallthru
      _
    // Predicated region
    $region18: #{causal_self_attention.3} parent=1 // pred_check
      _
    $region19: #{causal_self_attention.3} parent=1 // pred_check_branch
      %49 = sbr.rel (0) target = $region21
    $region20: #{causal_self_attention.3} parent=1 // pred_region
      %50 = dma.done [#allocation7], 256
    $region21: #{causal_self_attention.3} parent=1 // pred_fallthru
      _
    // Predicated region
    $region22: #{causal_self_attention.3} parent=1 // pred_check
      _
    $region23: #{causal_self_attention.3} parent=1 // pred_check_branch
      %52 = sbr.rel (0) target = $region25
    $region24: #{causal_self_attention.3} parent=1 // pred_region
      %53 = dma.done [#allocation7], 16
    $region25: #{causal_self_attention.3} parent=1 // pred_fallthru
      _
    %p55 = scmp.eq.s32.totalorder 0, 0
    // Predicated region
    $region26: #{causal_self_attention.3} parent=1 // pred_check
      %p56 = pneg %p55
    $region27: #{causal_self_attention.3} parent=1 // pred_check_branch
      %58 = sbr.rel (%p56) target = $region29
    $region28: #{causal_self_attention.3} parent=1 // pred_region
      %vm59 = vcmask 785408
      %60 = vst.msk [vmem:[#allocation2] sm:$0xff] %vm59, 0.0
      %61 = vst.msk [vmem:[#allocation2 + $0x8] sm:$0xff] %vm59, 0.0
    $region29: #{causal_self_attention.3} parent=1 // pred_fallthru
      _
    %v62 = vld [vmem:[#allocation2] sm:$0xff]
    %v63 = vld [vmem:[#allocation2 + $0x8] sm:$0xff]
    %v64 = vld [vmem:[#allocation3] sm:$0xff]
    %v65 = vld [vmem:[#allocation3 + $0x8] sm:$0xff]
    %v66 = vpack.c.bf16 %v65, %v64
    %v67 = vld [vmem:[#allocation6] sm:$0xf]
    %v68 = vld [vmem:[#allocation6 + $0x4] sm:$0xf]
    %v69 = vld [vmem:[#allocation6 + $0x8] sm:$0xf]
    %v70 = vld [vmem:[#allocation6 + $0xc] sm:$0xf]
    %v75 = vunpack.c.l.b16 %v67
    %v76 = vunpack.c.l.b16 %v68
    %v77 = vunpack.c.l.b16 %v69
    %v78 = vunpack.c.l.b16 %v70
    %v79 = vpack.c.b16 %v76, %v75
    %v80 = vpack.c.b16 %v78, %v77
    %vm83 = vcmask 261120
    %v85 = vsel %vm83, %v66, 0
    %87 = vmatprep.subr.bf16.mxu0 0
    %88 = vmatpush1.bf16.msra.mxu0 %v79
    %89 = vmatprep.subr.bf16.mxu0 0
    %90 = vmatpush1.bf16.msra.mxu0 %v80
    %91 = vmatprep.subr.bf16.mxu0 0
    %92 = vmatpush1.bf16.msra.mxu0 0
    %93 = vmatprep.subr.bf16.mxu0 0
    %94 = vmatpush1.bf16.msra.mxu0 0
    %95 = vmatprep.subr.bf16.mxu0 0
    %96 = vmatpush1.bf16.msra.mxu0 0
    %97 = vmatprep.subr.bf16.mxu0 0
    %98 = vmatpush1.bf16.msra.mxu0 0
    %99 = vmatprep.subr.bf16.mxu0 0
    %100 = vmatpush1.bf16.msra.mxu0 0
    %101 = vmatprep.subr.bf16.mxu0 0
    %102 = vmatpush1.bf16.msra.mxu0 0
    %103 = vmatprep.subr.bf16.mxu0 0
    %104 = vmatpush1.bf16.msra.mxu0 0
    %105 = vmatprep.subr.bf16.mxu0 0
    %106 = vmatpush1.bf16.msra.mxu0 0
    %107 = vmatprep.subr.bf16.mxu0 0
    %108 = vmatpush1.bf16.msra.mxu0 0
    %109 = vmatprep.subr.bf16.mxu0 0
    %110 = vmatpush1.bf16.msra.mxu0 0
    %111 = vmatprep.subr.bf16.mxu0 0
    %112 = vmatpush1.bf16.msra.mxu0 0
    %113 = vmatprep.subr.bf16.mxu0 0
    %114 = vmatpush1.bf16.msra.mxu0 0
    %115 = vmatprep.subr.bf16.mxu0 0
    %116 = vmatpush1.bf16.msra.mxu0 0
    %117 = vmatprep.subr.bf16.mxu0 0
    %118 = vmatpush1.bf16.msra.mxu0 0
    %119 = vmatprep.mubr.bf16.mxu0 0
    %120 = vmatmul.mubr.bf16.gmra.mrb[0].mxu0 %v85
    %v121 = vpop.f32.mrb[0].mxu0
    %v122 = vadd.f32 0.0, %v121
    %v123 = vpop.f32.mrb[0].mxu0
    %v124 = vpop.f32.mrb[0].mxu0
    %v125 = vadd.f32 0.0, %v124
    %v126 = vpop.f32.mrb[0].mxu0
    %127 = vdwg.mxu0
    %v128 = vadd.f32 %v62, %v122
    %v129 = vadd.f32 %v63, %v125
    %vm130 = vcmask 785408
    %131 = vst.msk [vmem:[#allocation2] sm:$0xff] %vm130, %v128
    %132 = vst.msk [vmem:[#allocation2 + $0x8] sm:$0xff] %vm130, %v129
    // Predicated region
    $region30: #{causal_self_attention.3} parent=1 // pred_check
      %p133 = pneg %p55
    $region31: #{causal_self_attention.3} parent=1 // pred_check_branch
      %135 = sbr.rel (%p133) target = $region33
    $region32: #{causal_self_attention.3} parent=1 // pred_region
      %v136 = vld [vmem:[#allocation2] sm:$0xff]
      %v137 = vld [vmem:[#allocation2 + $0x8] sm:$0xff]
      %v138 = vld [vmem:[#allocation8] sm:$0x1]
      %v139 = vunpack.c.l.bf16 %v138
      %v140 = vlaneseq
      %v141 = vshrl.u32 %v140, 7
      %v142 = vsub.s32 0, %v141
      %v143 = vrot.slane %v139, %v142
      %v144 = vadd.f32 %v136, %v143
      %v145 = vadd.f32 %v137, %v143
      %v146 = vpack.c.bf16 %v145, %v144
      %v148 = vunpack.c.l.b16 %v146
      %v149 = vunpack.c.h.b16 %v146
      %v150 = vpack.c.b16 %v148, %v148
      %v151 = vpack.c.b16 %v149, %v149
      %vm154 = vcmask 781312
      %155 = vst.msk [vmem:[#allocation9] sm:$0xf] %vm154, %v150
      %156 = vst.msk [vmem:[#allocation9 + $0x4] sm:$0xf] %vm154, %v151
    $region33: #{causal_self_attention.3} parent=1 // pred_fallthru
      _
    // Predicated region
    $region34: #{causal_self_attention.3} parent=1 // pred_check
      _
    $region35: #{causal_self_attention.3} parent=1 // pred_check_branch
      %158 = sbr.rel (0) target = $region37
    $region36: #{causal_self_attention.3} parent=1 // pred_region
      %s160 = ssub.s32 128, 128
      %161 = vsyncadd [#allocation5], %s160
      %s162 = sshll.u32 [#allocation9], 4
      %s163 = int_to_ptr.vmem [resolvable:$true] %s162
      %168 = dma.vmem_to_hbm [thread:$0]  %s163, 128, %s3, [#allocation5], 64, 64, 4
    $region37: #{causal_self_attention.3} parent=1 // pred_fallthru
      _
    // Predicated region
    $region38: #{causal_self_attention.3} parent=1 // pred_check
      _
    $region39: #{causal_self_attention.3} parent=1 // pred_check_branch
      %170 = sbr.rel (0) target = $region41
    $region40: #{causal_self_attention.3} parent=1 // pred_region
      %171 = dma.done [#allocation5], 128
    $region41: #{causal_self_attention.3} parent=1 // pred_fallthru
      _
    %172 = vsyncpa [#allocation4], 1
    %173 = vsyncpa [#allocation7], 1
    %174 = vsyncpa [#allocation5], 1

// kernel: causal_self_attention.5
$region0: #{causal_self_attention.5}
  #allocation0 [shape = 'u32[]', space=smem, size = 0x4, offset = 0x4, fixed_abs, tag = 'smem constant byte address 0x4 - core index']
  #allocation1 [shape = 'u32[144,128]{1,0:T(1,128)}', space=vmem, size = 0x12000, scoped, tag = 'internal scratch']
  #allocation2 [shape = 'f32[16,32]{1,0:T(8,128)}', space=vmem, size = 0x2000, scoped, tag = 'scratch operand']
  %s0 = inlined_call_operand.hbm [shape: bf16[16,32], index: 0, kind: input, shape index: {}]
  %s1 = inlined_call_operand.hbm [shape: bf16[32,32], index: 1, kind: input, shape index: {}]
  %s2 = inlined_call_operand.hbm [shape: bf16[1,32], index: 2, kind: input, shape index: {}]
  %s3 = inlined_call_operand.hbm [shape: f32[16,32], index: 3, kind: output, shape index: {}]
  %s4 = sld [smem:[#allocation0]]
  $region42: #{causal_self_attention.5} parent=0
    _
  %s6 = ssub.s32 1, %s4
  %s7 = scalar_select 0, %s6, %s4
  $region1: #{causal_self_attention.5} parent=0
    #allocation3 [shape = 'u8[4096]{0}', space=vmem, size = 0x1000, scoped, tag = 'input window, operand 0, single buffered']
    #allocation4 [shape = 's32[1]{0}', space=sflag, size = 0x4, scoped, tag = 'scoped memory for causal_self_attention.5']
    #allocation5 [shape = 's32[1]{0}', space=sflag, size = 0x4, scoped, tag = 'scoped memory for causal_self_attention.5']
    #allocation6 [shape = 'u8[8192]{0}', space=vmem, size = 0x2000, scoped, tag = 'input window, operand 1, single buffered']
    #allocation7 [shape = 's32[1]{0}', space=sflag, size = 0x4, scoped, tag = 'scoped memory for causal_self_attention.5']
    #allocation8 [shape = 'u8[512]{0}', space=vmem, size = 0x400, scoped, tag = 'input window, operand 2, single buffered']
    #allocation9 [shape = 'u8[8192]{0}', space=vmem, size = 0x2000, scoped, tag = 'output window, operand 0, single buffered']
    %8 = vsyncpa [#allocation4], 0
    %9 = vsyncpa [#allocation7], 0
    %10 = vsyncpa [#allocation5], 0
    // Predicated region
    $region2: #{causal_self_attention.5} parent=1 // pred_check
      _
    $region3: #{causal_self_attention.5} parent=1 // pred_check_branch
      %12 = sbr.rel (0) target = $region5
    $region4: #{causal_self_attention.5} parent=1 // pred_region
      %s14 = ssub.s32 128, 128
      %15 = vsyncadd [#allocation4], %s14
      %s16 = sshll.u32 [#allocation3], 4
      %s17 = int_to_ptr.vmem [resolvable:$true] %s16
      %22 = dma.hbm_to_vmem [thread:$0]  %s0, 128, %s17, [#allocation4], 64, 64, 4
    $region5: #{causal_self_attention.5} parent=1 // pred_fallthru
      _
    // Predicated region
    $region6: #{causal_self_attention.5} parent=1 // pred_check
      _
    $region7: #{causal_self_attention.5} parent=1 // pred_check_branch
      %24 = sbr.rel (0) target = $region9
    $region8: #{causal_self_attention.5} parent=1 // pred_region
      %s26 = ssub.s32 256, 256
      %27 = vsyncadd [#allocation7], %s26
      %s28 = sshll.u32 [#allocation6], 4
      %s29 = int_to_ptr.vmem [resolvable:$true] %s28
      %34 = dma.hbm_to_vmem [thread:$0]  %s1, 256, %s29, [#allocation7], 64, 64, 4
    $region9: #{causal_self_attention.5} parent=1 // pred_fallthru
      _
    // Predicated region
    $region10: #{causal_self_attention.5} parent=1 // pred_check
      _
    $region11: #{causal_self_attention.5} parent=1 // pred_check_branch
      %36 = sbr.rel (0) target = $region13
    $region12: #{causal_self_attention.5} parent=1 // pred_region
      %s38 = ssub.s32 16, 16
      %39 = vsyncadd [#allocation7], %s38
      %s41 = sshll.u32 [#allocation8], 4
      %s42 = int_to_ptr.vmem [resolvable:$true] %s41
      %44 = dma.hbm_to_vmem [thread:$0]  %s2, 16, %s42, [#allocation7]
    $region13: #{causal_self_attention.5} parent=1 // pred_fallthru
      _
    // Predicated region
    $region14: #{causal_self_attention.5} parent=1 // pred_check
      _
    $region15: #{causal_self_attention.5} parent=1 // pred_check_branch
      %46 = sbr.rel (0) target = $region17
    $region16: #{causal_self_attention.5} parent=1 // pred_region
      %47 = dma.done [#allocation4], 128
    $region17: #{causal_self_attention.5} parent=1 // pred_fallthru
      _
    // Predicated region
    $region18: #{causal_self_attention.5} parent=1 // pred_check
      _
    $region19: #{causal_self_attention.5} parent=1 // pred_check_branch
      %49 = sbr.rel (0) target = $region21
    $region20: #{causal_self_attention.5} parent=1 // pred_region
      %50 = dma.done [#allocation7], 256
    $region21: #{causal_self_attention.5} parent=1 // pred_fallthru
      _
    // Predicated region
    $region22: #{causal_self_attention.5} parent=1 // pred_check
      _
    $region23: #{causal_self_attention.5} parent=1 // pred_check_branch
      %52 = sbr.rel (0) target = $region25
    $region24: #{causal_self_attention.5} parent=1 // pred_region
      %53 = dma.done [#allocation7], 16
    $region25: #{causal_self_attention.5} parent=1 // pred_fallthru
      _
    %p55 = scmp.eq.s32.totalorder 0, 0
    // Predicated region
    $region26: #{causal_self_attention.5} parent=1 // pred_check
      %p56 = pneg %p55
    $region27: #{causal_self_attention.5} parent=1 // pred_check_branch
      %58 = sbr.rel (%p56) target = $region29
    $region28: #{causal_self_attention.5} parent=1 // pred_region
      %vm59 = vcmask 261120
      %60 = vst.msk [vmem:[#allocation2] sm:$0xff] %vm59, 0.0
      %61 = vst.msk [vmem:[#allocation2 + $0x8] sm:$0xff] %vm59, 0.0
    $region29: #{causal_self_attention.5} parent=1 // pred_fallthru
      _
    %v62 = vld [vmem:[#allocation2] sm:$0xff]
    %v63 = vld [vmem:[#allocation2 + $0x8] sm:$0xff]
    %v64 = vld [vmem:[#allocation3] sm:$0xf]
    %v65 = vld [vmem:[#allocation3 + $0x4] sm:$0xf]
    %v66 = vld [vmem:[#allocation6] sm:$0xf]
    %v67 = vld [vmem:[#allocation6 + $0x4] sm:$0xf]
    %v68 = vld [vmem:[#allocation6 + $0x8] sm:$0xf]
    %v69 = vld [vmem:[#allocation6 + $0xc] sm:$0xf]
    %v72 = vunpack.c.l.b16 %v64
    %v73 = vunpack.c.l.b16 %v65
    %v74 = vpack.c.b16 %v73, %v72
    %v79 = vunpack.c.l.b16 %v66
    %v80 = vunpack.c.l.b16 %v67
    %v81 = vunpack.c.l.b16 %v68
    %v82 = vunpack.c.l.b16 %v69
    %v83 = vpack.c.b16 %v80, %v79
    %v84 = vpack.c.b16 %v82, %v81
    %vm87 = vcmask 261120
    %v89 = vsel %vm87, %v74, 0
    %91 = vmatprep.subr.bf16.mxu0 0
    %92 = vmatpush1.bf16.msra.mxu0 %v83
    %93 = vmatprep.subr.bf16.mxu0 0
    %94 = vmatpush1.bf16.msra.mxu0 %v84
    %95 = vmatprep.subr.bf16.mxu0 0
    %96 = vmatpush1.bf16.msra.mxu0 0
    %97 = vmatprep.subr.bf16.mxu0 0
    %98 = vmatpush1.bf16.msra.mxu0 0
    %99 = vmatprep.subr.bf16.mxu0 0
    %100 = vmatpush1.bf16.msra.mxu0 0
    %101 = vmatprep.subr.bf16.mxu0 0
    %102 = vmatpush1.bf16.msra.mxu0 0
    %103 = vmatprep.subr.bf16.mxu0 0
    %104 = vmatpush1.bf16.msra.mxu0 0
    %105 = vmatprep.subr.bf16.mxu0 0
    %106 = vmatpush1.bf16.msra.mxu0 0
    %107 = vmatprep.subr.bf16.mxu0 0
    %108 = vmatpush1.bf16.msra.mxu0 0
    %109 = vmatprep.subr.bf16.mxu0 0
    %110 = vmatpush1.bf16.msra.mxu0 0
    %111 = vmatprep.subr.bf16.mxu0 0
    %112 = vmatpush1.bf16.msra.mxu0 0
    %113 = vmatprep.subr.bf16.mxu0 0
    %114 = vmatpush1.bf16.msra.mxu0 0
    %115 = vmatprep.subr.bf16.mxu0 0
    %116 = vmatpush1.bf16.msra.mxu0 0
    %117 = vmatprep.subr.bf16.mxu0 0
    %118 = vmatpush1.bf16.msra.mxu0 0
    %119 = vmatprep.subr.bf16.mxu0 0
    %120 = vmatpush1.bf16.msra.mxu0 0
    %121 = vmatprep.subr.bf16.mxu0 0
    %122 = vmatpush1.bf16.msra.mxu0 0
    %123 = vmatprep.mubr.bf16.mxu0 0
    %124 = vmatmul.mubr.bf16.gmra.mrb[0].mxu0 %v89
    %v125 = vpop.f32.mrb[0].mxu0
    %v126 = vadd.f32 0.0, %v125
    %v127 = vpop.f32.mrb[0].mxu0
    %v128 = vpop.f32.mrb[0].mxu0
    %v129 = vadd.f32 0.0, %v128
    %v130 = vpop.f32.mrb[0].mxu0
    %131 = vdwg.mxu0
    %v132 = vadd.f32 %v62, %v126
    %v133 = vadd.f32 %v63, %v129
    %134 = vst.msk [vmem:[#allocation2] sm:$0xff] %vm87, %v132
    %135 = vst.msk [vmem:[#allocation2 + $0x8] sm:$0xff] %vm87, %v133
    // Predicated region
    $region30: #{causal_self_attention.5} parent=1 // pred_check
      %p136 = pneg %p55
    $region31: #{causal_self_attention.5} parent=1 // pred_check_branch
      %138 = sbr.rel (%p136) target = $region33
    $region32: #{causal_self_attention.5} parent=1 // pred_region
      %v139 = vld [vmem:[#allocation2] sm:$0xff]
      %v140 = vld [vmem:[#allocation2 + $0x8] sm:$0xff]
      %v141 = vld [vmem:[#allocation8] sm:$0x1]
      %v142 = vunpack.c.l.bf16 %v141
      %v143 = vlaneseq
      %v144 = vshrl.u32 %v143, 7
      %v145 = vsub.s32 0, %v144
      %v146 = vrot.slane %v142, %v145
      %v147 = vadd.f32 %v139, %v146
      %v148 = vadd.f32 %v140, %v146
      %149 = vst.msk [vmem:[#allocation9] sm:$0xff] %vm87, %v147
      %150 = vst.msk [vmem:[#allocation9 + $0x8] sm:$0xff] %vm87, %v148
    $region33: #{causal_self_attention.5} parent=1 // pred_fallthru
      _
    // Predicated region
    $region34: #{causal_self_attention.5} parent=1 // pred_check
      _
    $region35: #{causal_self_attention.5} parent=1 // pred_check_branch
      %152 = sbr.rel (0) target = $region37
    $region36: #{causal_self_attention.5} parent=1 // pred_region
      %s154 = ssub.s32 256, 256
      %155 = vsyncadd [#allocation5], %s154
      %s156 = sshll.u32 [#allocation9], 4
      %s157 = int_to_ptr.vmem [resolvable:$true] %s156
      %162 = dma.vmem_to_hbm [thread:$0]  %s157, 256, %s3, [#allocation5], 128, 128, 8
    $region37: #{causal_self_attention.5} parent=1 // pred_fallthru
      _
    // Predicated region
    $region38: #{causal_self_attention.5} parent=1 // pred_check
      _
    $region39: #{causal_self_attention.5} parent=1 // pred_check_branch
      %164 = sbr.rel (0) target = $region41
    $region40: #{causal_self_attention.5} parent=1 // pred_region
      %165 = dma.done [#allocation5], 256
    $region41: #{causal_self_attention.5} parent=1 // pred_fallthru
      _
    %166 = vsyncpa [#allocation4], 1
    %167 = vsyncpa [#allocation7], 1
    %168 = vsyncpa [#allocation5], 1

// kernel: causal_self_attention.4
$region0: #{causal_self_attention.4}
  #allocation0 [shape = 'u32[]', space=smem, size = 0x4, offset = 0x4, fixed_abs, tag = 'smem constant byte address 0x4 - core index']
  #allocation1 [shape = 'u32[144,128]{1,0:T(1,128)}', space=vmem, size = 0x12000, scoped, tag = 'internal scratch']
  #allocation2 [shape = 'f32[8,1]{1,0:T(8,128)}', space=vmem, size = 0x1000, scoped, tag = 'scratch operand']
  #allocation3 [shape = 'f32[8,1]{1,0:T(8,128)}', space=vmem, size = 0x1000, scoped, tag = 'scratch operand']
  #allocation4 [shape = 'f32[8,8]{1,0:T(8,128)}', space=vmem, size = 0x1000, scoped, tag = 'scratch operand']
  #allocation5 [shape = 's32[1]{0}', space=sflag, size = 0x4, scoped, tag = 'scoped memory for causal_self_attention.4']
  #allocation6 [shape = 's32[1]{0:T(128)S(6)}', space=smem, size = 0x200, scoped, tag = 'prefetched SMEM operand 0']
  #allocation7 [shape = 's32[1]{0:T(128)S(6)}', space=smem, size = 0x200, scoped, tag = 'prefetched SMEM operand 1']
  %s0 = inlined_call_operand.<no memory space> [shape: s32[1], index: 0, kind: input, shape index: {}, may-alias: {0,1}]
  %s1 = inlined_call_operand.<no memory space> [shape: s32[1], index: 1, kind: input, shape index: {}, may-alias: {0,1}]
  %s2 = inlined_call_operand.hbm [shape: bf16[8,8,8], index: 2, kind: input, shape index: {}]
  %s3 = inlined_call_operand.hbm [shape: bf16[8,8,8], index: 3, kind: input, shape index: {}]
  %s4 = inlined_call_operand.hbm [shape: bf16[8,8,8], index: 4, kind: input, shape index: {}]
  %s5 = inlined_call_operand.hbm [shape: bf16[8,8,8], index: 5, kind: output, shape index: {}]
  %s6 = sld [smem:[#allocation0]]
  $region69: #{causal_self_attention.4} parent=0
    _
  %s8 = ssub.s32 1, %s6
  %s9 = scalar_select 0, %s8, %s6
  %10 = sst [smem:[#allocation6]] %s0
  %11 = sst [smem:[#allocation7]] %s1
  $region1: #{causal_self_attention.4} parent=0
    #allocation8 [shape = 'u8[4096]{0}', space=vmem, size = 0x1000, scoped, tag = 'input window, operand 2']
    #allocation9 [shape = 's32[2]{0}', space=sflag, size = 0x8, scoped, tag = 'scoped memory for causal_self_attention.4']
    #allocation10 [shape = 's32[2]{0}', space=sflag, size = 0x8, scoped, tag = 'scoped memory for causal_self_attention.4']
    #allocation11 [shape = 'u8[4096]{0}', space=vmem, size = 0x1000, scoped, tag = 'input window, operand 3']
    #allocation12 [shape = 's32[2]{0}', space=sflag, size = 0x8, scoped, tag = 'scoped memory for causal_self_attention.4']
    #allocation13 [shape = 'u8[4096]{0}', space=vmem, size = 0x1000, scoped, tag = 'input window, operand 4']
    #allocation14 [shape = 'u8[4096]{0}', space=vmem, size = 0x1000, scoped, tag = 'output window, operand 0']
    %12 = vsyncpa [#allocation9], 0
    %s13 = scalar_lea.sflag [#allocation9], 1
    %14 = vsyncpa %s13, 0
    %15 = vsyncpa [#allocation12], 0
    %s16 = scalar_lea.sflag [#allocation12], 1
    %17 = vsyncpa %s16, 0
    %18 = vsyncpa [#allocation10], 0
    %s19 = scalar_lea.sflag [#allocation10], 1
    %20 = vsyncpa %s19, 0
    loop: start=0, step=1, limit=10
    $region2: #{causal_self_attention.4} parent=1 // loop_pre_header
      _
    $region3: #{causal_self_attention.4} parent=1 // loop_header
      %s22 = sphi 0, %s26
      %p23 = scmp.ge.s32.totalorder %s22, 10
      %s29 = sphi 0, %s41
      %s30 = sphi 0, %s37
      %s31 = sphi 0, %s29
      %s32 = sphi 0, %s30
      %s33 = sphi 0, %s31
      %s34 = sphi 0, %s32
      %s48 = sphi 0, %s50
      %s51 = sphi 0, %s48
      %s52 = sphi 0, %s51
      %s68 = sphi 0, %s52
      %s78 = sphi 0, %s80
      %s81 = sphi 0, %s78
      %s82 = sphi 0, %s81
      %s98 = sphi 0, %s82
      %s108 = sphi 0, %s110
      %s111 = sphi 0, %s108
      %s112 = sphi 0, %s111
      %s128 = sphi 0, %s112
      %s138 = sphi 0, %s140
      %s141 = sphi 0, %s138
      %s142 = sphi 0, %s141
      %s158 = sphi 0, %s142
    $region4: #{causal_self_attention.4} parent=1 // loop_header_branch
      %25 = sbr.rel (%p23) target = $region8
    $region5: #{causal_self_attention.4} parent=1 // loop_body
      %s27 = ssub.s32 %s22, 1
      %s28 = ssub.s32 %s22, 2
      %s35 = sadd.s32 1, %s30
      %p36 = scmp.ge.s32.totalorder %s35, 1
      %s37 = scalar_select %p36, 0, %s35
      %s38 = sadd.s32 1, %s29
      %s39 = scalar_select %p36, %s38, %s29
      %p40 = scmp.ge.s32.totalorder %s39, 8
      %s41 = scalar_select %p40, 0, %s39
      %s42 = sld [smem:[#allocation6 + %s30]]
      %s43 = sld [smem:[#allocation6 + %s37]]
      %s44 = ssub.s32 %s29, %s41
      %s45 = ssub.s32 %s42, %s43
      %s46 = sor.u32 %s44, %s45
      %p47 = scmp.eq.s32.totalorder %s46, 0
      %s49 = sadd.s32 %s48, 1
      %s50 = scalar_select %p47, %s48, %s49
      %p53 = pneg %p47
      %p54 = scmp.eq.s32.totalorder %s22, 7
      %p55 = por %p53, %p54
      %p56 = scmp.ne.s32.totalorder %s48, %s51
      %p57 = scmp.eq.s32.totalorder %s22, 0
      %p58 = por %p56, %p57
      %p59 = scmp.ne.s32.totalorder %s48, %s51
      %p60 = scmp.eq.s32.totalorder %s27, 7
      %p61 = por %p59, %p60
      %p62 = scmp.ne.s32.totalorder %s51, %s52
      %p63 = scmp.eq.s32.totalorder %s27, 0
      %p64 = por %p62, %p63
      %p65 = scmp.ne.s32.totalorder %s51, %s52
      %p66 = scmp.eq.s32.totalorder %s28, 7
      %p67 = por %p65, %p66
      %p69 = scmp.ne.s32.totalorder %s52, %s68
      %p70 = scmp.eq.s32.totalorder %s28, 0
      %p71 = por %p69, %p70
      %s72 = sld [smem:[#allocation7 + %s30]]
      %s73 = sld [smem:[#allocation7 + %s37]]
      %s74 = ssub.s32 %s29, %s41
      %s75 = ssub.s32 %s72, %s73
      %s76 = sor.u32 %s74, %s75
      %p77 = scmp.eq.s32.totalorder %s76, 0
      %s79 = sadd.s32 %s78, 1
      %s80 = scalar_select %p77, %s78, %s79
      %p83 = pneg %p77
      %p84 = scmp.eq.s32.totalorder %s22, 7
      %p85 = por %p83, %p84
      %p86 = scmp.ne.s32.totalorder %s78, %s81
      %p87 = scmp.eq.s32.totalorder %s22, 0
      %p88 = por %p86, %p87
      %p89 = scmp.ne.s32.totalorder %s78, %s81
      %p90 = scmp.eq.s32.totalorder %s27, 7
      %p91 = por %p89, %p90
      %p92 = scmp.ne.s32.totalorder %s81, %s82
      %p93 = scmp.eq.s32.totalorder %s27, 0
      %p94 = por %p92, %p93
      %p95 = scmp.ne.s32.totalorder %s81, %s82
      %p96 = scmp.eq.s32.totalorder %s28, 7
      %p97 = por %p95, %p96
      %p99 = scmp.ne.s32.totalorder %s82, %s98
      %p100 = scmp.eq.s32.totalorder %s28, 0
      %p101 = por %p99, %p100
      %s102 = sld [smem:[#allocation7 + %s30]]
      %s103 = sld [smem:[#allocation7 + %s37]]
      %s104 = ssub.s32 %s29, %s41
      %s105 = ssub.s32 %s102, %s103
      %s106 = sor.u32 %s104, %s105
      %p107 = scmp.eq.s32.totalorder %s106, 0
      %s109 = sadd.s32 %s108, 1
      %s110 = scalar_select %p107, %s108, %s109
      %p113 = pneg %p107
      %p114 = scmp.eq.s32.totalorder %s22, 7
      %p115 = por %p113, %p114
      %p116 = scmp.ne.s32.totalorder %s108, %s111
      %p117 = scmp.eq.s32.totalorder %s22, 0
      %p118 = por %p116, %p117
      %p119 = scmp.ne.s32.totalorder %s108, %s111
      %p120 = scmp.eq.s32.totalorder %s27, 7
      %p121 = por %p119, %p120
      %p122 = scmp.ne.s32.totalorder %s111, %s112
      %p123 = scmp.eq.s32.totalorder %s27, 0
      %p124 = por %p122, %p123
      %p125 = scmp.ne.s32.totalorder %s111, %s112
      %p126 = scmp.eq.s32.totalorder %s28, 7
      %p127 = por %p125, %p126
      %p129 = scmp.ne.s32.totalorder %s112, %s128
      %p130 = scmp.eq.s32.totalorder %s28, 0
      %p131 = por %p129, %p130
      %s132 = sld [smem:[#allocation6 + %s30]]
      %s133 = sld [smem:[#allocation6 + %s37]]
      %s134 = ssub.s32 %s29, %s41
      %s135 = ssub.s32 %s132, %s133
      %s136 = sor.u32 %s134, %s135
      %p137 = scmp.eq.s32.totalorder %s136, 0
      %s139 = sadd.s32 %s138, 1
      %s140 = scalar_select %p137, %s138, %s139
      %p143 = pneg %p137
      %p144 = scmp.eq.s32.totalorder %s22, 7
      %p145 = por %p143, %p144
      %p146 = scmp.ne.s32.totalorder %s138, %s141
      %p147 = scmp.eq.s32.totalorder %s22, 0
      %p148 = por %p146, %p147
      %p149 = scmp.ne.s32.totalorder %s138, %s141
      %p150 = scmp.eq.s32.totalorder %s27, 7
      %p151 = por %p149, %p150
      %p152 = scmp.ne.s32.totalorder %s141, %s142
      %p153 = scmp.eq.s32.totalorder %s27, 0
      %p154 = por %p152, %p153
      %p155 = scmp.ne.s32.totalorder %s141, %s142
      %p156 = scmp.eq.s32.totalorder %s28, 7
      %p157 = por %p155, %p156
      %p159 = scmp.ne.s32.totalorder %s142, %s158
      %p160 = scmp.eq.s32.totalorder %s28, 0
      %p161 = por %p159, %p160
      %p162 = scmp.le.s32.totalorder 1, %s22
      %p163 = scmp.lt.s32.totalorder %s22, 9
      %p164 = pnand %p162, %p163
      %p165 = pneg %p164
      // Predicated region
      $region9: #{causal_self_attention.4} parent=5 // pred_check
        _
      $region10: #{causal_self_attention.4} parent=5 // pred_check_branch
        %167 = sbr.rel (%p164) target = $region12
      $region11: #{causal_self_attention.4} parent=5 // pred_region
        %s168 = ssub.s32 %s22, 1
      $region12: #{causal_self_attention.4} parent=5 // pred_fallthru
        _
      %p169 = scmp.lt.s32.totalorder %s22, 8
      // Predicated region
      $region13: #{causal_self_attention.4} parent=5 // pred_check
        %p170 = pneg %p169
      $region14: #{causal_self_attention.4} parent=5 // pred_check_branch
        %172 = sbr.rel (%p170) target = $region16
      $region15: #{causal_self_attention.4} parent=5 // pred_region
        // Predicated region
        $region17: #{causal_self_attention.4} parent=15 // pred_check
          %p173 = pneg %p58
        $region18: #{causal_self_attention.4} parent=15 // pred_check_branch
          %175 = sbr.rel (%p173) target = $region20
        $region19: #{causal_self_attention.4} parent=15 // pred_region
          %s176 = sand.u32 %s48, 1
          %s177 = scalar_lea.sflag [#allocation9], %s176
          %s178 = sand.u32 %s48, 1
          %s179 = smul.addr %s178, 4
          %s180 = scalar_lea.vmem [#allocation8], %s179
          %s181 = sld [smem:[#allocation6 + %s30]]
          %s183 = ssub.s32 64, 64
          %184 = vsyncadd %s177, %s183
          %s185 = sadd.s32 %s181, %s29
          %s186 = smul.addr %s185, 64
          %s187 = scalar_lea.hbm %s2, %s186
          %s189 = sshll.u32 %s180, 4
          %s190 = int_to_ptr.vmem [resolvable:$true] %s189
          %192 = dma.hbm_to_vmem [thread:$0]  %s187, 64, %s190, %s177
        $region20: #{causal_self_attention.4} parent=15 // pred_fallthru
          _
        // Predicated region
        $region21: #{causal_self_attention.4} parent=15 // pred_check
          %p193 = pneg %p88
        $region22: #{causal_self_attention.4} parent=15 // pred_check_branch
          %195 = sbr.rel (%p193) target = $region24
        $region23: #{causal_self_attention.4} parent=15 // pred_region
          %s196 = sand.u32 %s22, 1
          %s197 = scalar_lea.sflag [#allocation12], %s196
          %s198 = sand.u32 %s78, 1
          %s199 = smul.addr %s198, 4
          %s200 = scalar_lea.vmem [#allocation11], %s199
          %s201 = sld [smem:[#allocation7 + %s30]]
          %s203 = ssub.s32 64, 64
          %204 = vsyncadd %s197, %s203
          %s205 = sadd.s32 %s201, %s29
          %s206 = smul.addr %s205, 64
          %s207 = scalar_lea.hbm %s3, %s206
          %s209 = sshll.u32 %s200, 4
          %s210 = int_to_ptr.vmem [resolvable:$true] %s209
          %212 = dma.hbm_to_vmem [thread:$0]  %s207, 64, %s210, %s197
        $region24: #{causal_self_attention.4} parent=15 // pred_fallthru
          _
        // Predicated region
        $region25: #{causal_self_attention.4} parent=15 // pred_check
          %p213 = pneg %p118
        $region26: #{causal_self_attention.4} parent=15 // pred_check_branch
          %215 = sbr.rel (%p213) target = $region28
        $region27: #{causal_self_attention.4} parent=15 // pred_region
          %s216 = sand.u32 %s22, 1
          %s217 = scalar_lea.sflag [#allocation12], %s216
          %s218 = sand.u32 %s108, 1
          %s219 = smul.addr %s218, 4
          %s220 = scalar_lea.vmem [#allocation13], %s219
          %s221 = sld [smem:[#allocation7 + %s30]]
          %s223 = ssub.s32 64, 64
          %224 = vsyncadd %s217, %s223
          %s225 = sadd.s32 %s221, %s29
          %s226 = smul.addr %s225, 64
          %s227 = scalar_lea.hbm %s4, %s226
          %s229 = sshll.u32 %s220, 4
          %s230 = int_to_ptr.vmem [resolvable:$true] %s229
          %232 = dma.hbm_to_vmem [thread:$0]  %s227, 64, %s230, %s217
        $region28: #{causal_self_attention.4} parent=15 // pred_fallthru
          _
      $region16: #{causal_self_attention.4} parent=5 // pred_fallthru
        _
      %p233 = scmp.le.s32.totalorder 1, %s22
      %p234 = scmp.lt.s32.totalorder %s22, 9
      %p235 = pnand %p233, %p234
      %p236 = pneg %p235
      // Predicated region
      $region29: #{causal_self_attention.4} parent=5 // pred_check
        _
      $region30: #{causal_self_attention.4} parent=5 // pred_check_branch
        %238 = sbr.rel (%p235) target = $region32
      $region31: #{causal_self_attention.4} parent=5 // pred_region
        %s239 = ssub.s32 %s22, 1
        %s240 = sand.u32 %s51, 1
        %s241 = scalar_lea.sflag [#allocation9], %s240
        %s242 = sand.u32 %s51, 1
        %s243 = smul.addr %s242, 4
        %s244 = scalar_lea.vmem [#allocation8], %s243
        // Predicated region
        $region33: #{causal_self_attention.4} parent=31 // pred_check
          %p245 = pneg %p64
        $region34: #{causal_self_attention.4} parent=31 // pred_check_branch
          %247 = sbr.rel (%p245) target = $region36
        $region35: #{causal_self_attention.4} parent=31 // pred_region
          %248 = dma.done %s241, 64
        $region36: #{causal_self_attention.4} parent=31 // pred_fallthru
          _
        %s249 = sand.u32 %s27, 1
        %s250 = scalar_lea.sflag [#allocation12], %s249
        %s251 = sand.u32 %s81, 1
        %s252 = smul.addr %s251, 4
        %s253 = scalar_lea.vmem [#allocation11], %s252
        // Predicated region
        $region37: #{causal_self_attention.4} parent=31 // pred_check
          %p254 = pneg %p94
        $region38: #{causal_self_attention.4} parent=31 // pred_check_branch
          %256 = sbr.rel (%p254) target = $region40
        $region39: #{causal_self_attention.4} parent=31 // pred_region
          %257 = dma.done %s250, 64
        $region40: #{causal_self_attention.4} parent=31 // pred_fallthru
          _
        %s258 = sand.u32 %s27, 1
        %s259 = scalar_lea.sflag [#allocation12], %s258
        %s260 = sand.u32 %s111, 1
        %s261 = smul.addr %s260, 4
        %s262 = scalar_lea.vmem [#allocation13], %s261
        // Predicated region
        $region41: #{causal_self_attention.4} parent=31 // pred_check
          %p263 = pneg %p124
        $region42: #{causal_self_attention.4} parent=31 // pred_check_branch
          %265 = sbr.rel (%p263) target = $region44
        $region43: #{causal_self_attention.4} parent=31 // pred_region
          %266 = dma.done %s259, 64
        $region44: #{causal_self_attention.4} parent=31 // pred_fallthru
          _
        %s267 = sand.u32 %s51, 1
        %s268 = scalar_lea.sflag [#allocation9], %s267
        %s269 = sand.u32 %s51, 1
        %s270 = smul.addr %s269, 4
        %s271 = scalar_lea.vmem [#allocation8], %s270
        %p272 = pneg %p64
        %p273 = pneg %p61
        %s274 = sand.u32 %s27, 1
        %s275 = scalar_lea.sflag [#allocation12], %s274
        %s276 = sand.u32 %s81, 1
        %s277 = smul.addr %s276, 4
        %s278 = scalar_lea.vmem [#allocation11], %s277
        %p279 = pneg %p94
        %p280 = pneg %p91
        %s281 = sand.u32 %s27, 1
        %s282 = scalar_lea.sflag [#allocation12], %s281
        %s283 = sand.u32 %s111, 1
        %s284 = smul.addr %s283, 4
        %s285 = scalar_lea.vmem [#allocation13], %s284
        %p286 = pneg %p124
        %p287 = pneg %p121
        %p288 = pneg %p154
        %p289 = pneg %p151
        %s290 = sand.u32 %s141, 1
        %s291 = scalar_lea.sflag [#allocation10], %s290
        %s292 = sand.u32 %s141, 1
        %s293 = smul.addr %s292, 4
        %s294 = scalar_lea.vmem [#allocation14], %s293
        %s295 = sld [smem:[#allocation6 + %s32]]
        %s296 = sld [smem:[#allocation7 + %s32]]
        %s297 = sld [smem:[#allocation7 + %s32]]
        %s298 = sld [smem:[#allocation6 + %s32]]
        %s300 = sld [smem:[#allocation6 + %s32]]
        %s301 = sld [smem:[#allocation7 + %s32]]
        %p302 = scmp.eq.s32.totalorder %s301, 0
        // Predicated region
        $region45: #{causal_self_attention.4} parent=31 // pred_check
          %p303 = pneg %p302
        $region46: #{causal_self_attention.4} parent=31 // pred_check_branch
          %305 = sbr.rel (%p303) target = $region48
        $region47: #{causal_self_attention.4} parent=31 // pred_region
          %vm306 = vcmask 7168
          %307 = vst.msk [vmem:[#allocation2] sm:$0xff] %vm306, -1e+30
          %308 = vst.msk [vmem:[#allocation3] sm:$0xff] %vm306, 0.0
          %vm309 = vcmask 64512
          %310 = vst.msk [vmem:[#allocation4] sm:$0xff] %vm309, 0.0
        $region48: #{causal_self_attention.4} parent=31 // pred_fallthru
          _
        %p311 = scmp.lt.s32.totalorder %s301, %s300
        // Predicated region
        $region49: #{causal_self_attention.4} parent=31 // pred_check
          %p312 = pneg %p311
        $region50: #{causal_self_attention.4} parent=31 // pred_check_branch
          %314 = sbr.rel (%p312) target = $region52
        $region51: #{causal_self_attention.4} parent=31 // pred_region
          %v315 = vld [vmem:[%s244] sm:$0xf]
          %v316 = vld [vmem:[%s253] sm:$0xf]
          %vm317 = vcmask 64512
          %v319 = vsel %vm317, %v315, 0
          %v322 = vsel %vm317, %v316, 0
          %324 = vmatprep.subr.bf16.mxu0 0
          %325 = vmatpush1.bf16.xpose.msra.mxu0 %v322
          %326 = vmatprep.subr.bf16.mxu0 0
          %327 = vmatpush1.bf16.xpose.msra.mxu0 0
          %328 = vmatprep.subr.bf16.mxu0 0
          %329 = vmatpush1.bf16.xpose.msra.mxu0 0
          %330 = vmatprep.subr.bf16.mxu0 0
          %331 = vmatpush1.bf16.xpose.msra.mxu0 0
          %332 = vmatprep.subr.bf16.mxu0 0
          %333 = vmatpush1.bf16.xpose.msra.mxu0 0
          %334 = vmatprep.subr.bf16.mxu0 0
          %335 = vmatpush1.bf16.xpose.msra.mxu0 0
          %336 = vmatprep.subr.bf16.mxu0 0
          %337 = vmatpush1.bf16.xpose.msra.mxu0 0
          %338 = vmatprep.subr.bf16.mxu0 0
          %339 = vmatpush1.bf16.xpose.msra.mxu0 0
          %340 = vmatprep.subr.bf16.mxu0 0
          %341 = vmatpush1.bf16.xpose.msra.mxu0 0
          %342 = vmatprep.subr.bf16.mxu0 0
          %343 = vmatpush1.bf16.xpose.msra.mxu0 0
          %344 = vmatprep.subr.bf16.mxu0 0
          %345 = vmatpush1.bf16.xpose.msra.mxu0 0
          %346 = vmatprep.subr.bf16.mxu0 0
          %347 = vmatpush1.bf16.xpose.msra.mxu0 0
          %348 = vmatprep.subr.bf16.mxu0 0
          %349 = vmatpush1.bf16.xpose.msra.mxu0 0
          %350 = vmatprep.subr.bf16.mxu0 0
          %351 = vmatpush1.bf16.xpose.msra.mxu0 0
          %352 = vmatprep.subr.bf16.mxu0 0
          %353 = vmatpush1.bf16.xpose.msra.mxu0 0
          %354 = vmatprep.subr.bf16.mxu0 0
          %355 = vmatpush1.bf16.xpose.msra.mxu0 0
          %356 = vmatprep.mubr.bf16.mxu0 0
          %357 = vmatmul.mubr.bf16.gmra.mrb[0].mxu0 %v319
          %v358 = vpop.f32.mrb[0].mxu0
          %v359 = vadd.f32 0.0, %v358
          %v360 = vpop.f32.mrb[0].mxu0
          %v361 = vpop.f32.mrb[0].mxu0
          %v362 = vpop.f32.mrb[0].mxu0
          %363 = vdwg.mxu0
          %v364 = vld [vmem:[#allocation2] sm:$0xff]
          %v365 = vsel %vm317, %v359, -inf
          %366 = vmax.xlane.f32.xlu0 %v365
          %v367 = vpop.xlane.xlu0 %366
          %v368 = vmax.f32 %v364, %v367
          %v369 = vsub.f32 %v364, %v368
          %v370 = vmul.f32 %v369, 1.442695
          %v371 = vpow.pop %v370
          %373 = vset.pattern.permute.xlu0 0
          %374 = vperm.xlu0 %373, %v368
          %v375 = vpop.permute.xlu0 %374
          %v377 = vsub.f32 %v359, %v375
          %v378 = vmul.f32 %v377, 1.442695
          %v379 = vpow.pop %v378
          %v380 = vld [vmem:[#allocation3] sm:$0xff]
          %v381 = vmul.f32 %v371, %v380
          %v382 = vsel %vm317, %v379, 0.0
          %383 = vadd.xlane.f32.xlu0 %v382
          %v384 = vpop.xlane.xlu0 %383
          %v385 = vadd.f32 %v381, %v384
          %vm386 = vcmask 7168
          %387 = vst.msk [vmem:[#allocation3] sm:$0xff] %vm386, %v385
          %v388 = vld [vmem:[#allocation4] sm:$0xff]
          %390 = vset.pattern.permute.xlu0 0
          %391 = vperm.xlu0 %390, %v371
          %v392 = vpop.permute.xlu0 %391
          %v394 = vmul.f32 %v392, %v388
          %v395 = vpack.c.bf16 %v379, %v379
          %v396 = vld [vmem:[%s262] sm:$0xf]
          %v398 = vsel %vm317, %v395, 0
          %vm400 = vcmask 1043456
          %v402 = vsel %vm400, %v396, 0
          %404 = vmatprep.subr.bf16.mxu0 0
          %405 = vmatpush1.bf16.msra.mxu0 %v402
          %406 = vmatprep.subr.bf16.mxu0 0
          %407 = vmatpush1.bf16.msra.mxu0 0
          %408 = vmatprep.subr.bf16.mxu0 0
          %409 = vmatpush1.bf16.msra.mxu0 0
          %410 = vmatprep.subr.bf16.mxu0 0
          %411 = vmatpush1.bf16.msra.mxu0 0
          %412 = vmatprep.subr.bf16.mxu0 0
          %413 = vmatpush1.bf16.msra.mxu0 0
          %414 = vmatprep.subr.bf16.mxu0 0
          %415 = vmatpush1.bf16.msra.mxu0 0
          %416 = vmatprep.subr.bf16.mxu0 0
          %417 = vmatpush1.bf16.msra.mxu0 0
          %418 = vmatprep.subr.bf16.mxu0 0
          %419 = vmatpush1.bf16.msra.mxu0 0
          %420 = vmatprep.subr.bf16.mxu0 0
          %421 = vmatpush1.bf16.msra.mxu0 0
          %422 = vmatprep.subr.bf16.mxu0 0
          %423 = vmatpush1.bf16.msra.mxu0 0
          %424 = vmatprep.subr.bf16.mxu0 0
          %425 = vmatpush1.bf16.msra.mxu0 0
          %426 = vmatprep.subr.bf16.mxu0 0
          %427 = vmatpush1.bf16.msra.mxu0 0
          %428 = vmatprep.subr.bf16.mxu0 0
          %429 = vmatpush1.bf16.msra.mxu0 0
          %430 = vmatprep.subr.bf16.mxu0 0
          %431 = vmatpush1.bf16.msra.mxu0 0
          %432 = vmatprep.subr.bf16.mxu0 0
          %433 = vmatpush1.bf16.msra.mxu0 0
          %434 = vmatprep.subr.bf16.mxu0 0
          %435 = vmatpush1.bf16.msra.mxu0 0
          %436 = vmatprep.mubr.bf16.mxu0 0
          %437 = vmatmul.mubr.bf16.gmra.mrb[0].mxu0 %v398
          %v438 = vpop.f32.mrb[0].mxu0
          %v439 = vadd.f32 0.0, %v438
          %v440 = vpop.f32.mrb[0].mxu0
          %v441 = vpop.f32.mrb[0].mxu0
          %v442 = vpop.f32.mrb[0].mxu0
          %443 = vdwg.mxu0
          %v444 = vadd.f32 %v394, %v439
          %445 = vst.msk [vmem:[#allocation4] sm:$0xff] %vm317, %v444
          %446 = vst.msk [vmem:[#allocation2] sm:$0xff] %vm386, %v368
        $region52: #{causal_self_attention.4} parent=31 // pred_fallthru
          _
        %p447 = scmp.eq.s32.totalorder %s301, %s300
        // Predicated region
        $region53: #{causal_self_attention.4} parent=31 // pred_check
          %p448 = pneg %p447
        $region54: #{causal_self_attention.4} parent=31 // pred_check_branch
          %450 = sbr.rel (%p448) target = $region56
        $region55: #{causal_self_attention.4} parent=31 // pred_region
          %v451 = vld [vmem:[%s244] sm:$0xf]
          %v452 = vld [vmem:[%s253] sm:$0xf]
          %vm453 = vcmask 64512
          %v455 = vsel %vm453, %v451, 0
          %v458 = vsel %vm453, %v452, 0
          %460 = vmatprep.subr.bf16.mxu0 0
          %461 = vmatpush1.bf16.xpose.msra.mxu0 %v458
          %462 = vmatprep.subr.bf16.mxu0 0
          %463 = vmatpush1.bf16.xpose.msra.mxu0 0
          %464 = vmatprep.subr.bf16.mxu0 0
          %465 = vmatpush1.bf16.xpose.msra.mxu0 0
          %466 = vmatprep.subr.bf16.mxu0 0
          %467 = vmatpush1.bf16.xpose.msra.mxu0 0
          %468 = vmatprep.subr.bf16.mxu0 0
          %469 = vmatpush1.bf16.xpose.msra.mxu0 0
          %470 = vmatprep.subr.bf16.mxu0 0
          %471 = vmatpush1.bf16.xpose.msra.mxu0 0
          %472 = vmatprep.subr.bf16.mxu0 0
          %473 = vmatpush1.bf16.xpose.msra.mxu0 0
          %474 = vmatprep.subr.bf16.mxu0 0
          %475 = vmatpush1.bf16.xpose.msra.mxu0 0
          %476 = vmatprep.subr.bf16.mxu0 0
          %477 = vmatpush1.bf16.xpose.msra.mxu0 0
          %478 = vmatprep.subr.bf16.mxu0 0
          %479 = vmatpush1.bf16.xpose.msra.mxu0 0
          %480 = vmatprep.subr.bf16.mxu0 0
          %481 = vmatpush1.bf16.xpose.msra.mxu0 0
          %482 = vmatprep.subr.bf16.mxu0 0
          %483 = vmatpush1.bf16.xpose.msra.mxu0 0
          %484 = vmatprep.subr.bf16.mxu0 0
          %485 = vmatpush1.bf16.xpose.msra.mxu0 0
          %486 = vmatprep.subr.bf16.mxu0 0
          %487 = vmatpush1.bf16.xpose.msra.mxu0 0
          %488 = vmatprep.subr.bf16.mxu0 0
          %489 = vmatpush1.bf16.xpose.msra.mxu0 0
          %490 = vmatprep.subr.bf16.mxu0 0
          %491 = vmatpush1.bf16.xpose.msra.mxu0 0
          %492 = vmatprep.mubr.bf16.mxu0 0
          %493 = vmatmul.mubr.bf16.gmra.mrb[0].mxu0 %v455
          %v494 = vpop.f32.mrb[0].mxu0
          %v495 = vadd.f32 0.0, %v494
          %v496 = vpop.f32.mrb[0].mxu0
          %v497 = vpop.f32.mrb[0].mxu0
          %v498 = vpop.f32.mrb[0].mxu0
          %499 = vdwg.mxu0
          %v500 = vlaneseq
          %v501 = vshrl.u32 %v500, 7
          %s502 = smul.u32 %s300, 8
          %v503 = vstv %s502
          %v504 = vadd.s32 %v501, %v503
          %v505 = vlaneseq
          %v506 = vand.u32 %v505, 127
          %s507 = smul.u32 %s301, 8
          %v508 = vstv %s507
          %v509 = vadd.s32 %v506, %v508
          %vm510 = vcmp.le.s32.totalorder %v509, %v504
          %v511 = vsel %vm510, %v495, -1e+30
          %v512 = vld [vmem:[#allocation2] sm:$0xff]
          %v513 = vsel %vm453, %v511, -inf
          %514 = vmax.xlane.f32.xlu0 %v513
          %v515 = vpop.xlane.xlu0 %514
          %v516 = vmax.f32 %v512, %v515
          %v517 = vsub.f32 %v512, %v516
          %v518 = vmul.f32 %v517, 1.442695
          %v519 = vpow.pop %v518
          %521 = vset.pattern.permute.xlu0 0
          %522 = vperm.xlu0 %521, %v516
          %v523 = vpop.permute.xlu0 %522
          %v525 = vsub.f32 %v511, %v523
          %v526 = vmul.f32 %v525, 1.442695
          %v527 = vpow.pop %v526
          %v528 = vld [vmem:[#allocation3] sm:$0xff]
          %v529 = vmul.f32 %v519, %v528
          %v530 = vsel %vm453, %v527, 0.0
          %531 = vadd.xlane.f32.xlu0 %v530
          %v532 = vpop.xlane.xlu0 %531
          %v533 = vadd.f32 %v529, %v532
          %vm534 = vcmask 7168
          %535 = vst.msk [vmem:[#allocation3] sm:$0xff] %vm534, %v533
          %v536 = vld [vmem:[#allocation4] sm:$0xff]
          %538 = vset.pattern.permute.xlu0 0
          %539 = vperm.xlu0 %538, %v519
          %v540 = vpop.permute.xlu0 %539
          %v542 = vmul.f32 %v540, %v536
          %v543 = vpack.c.bf16 %v527, %v527
          %v544 = vld [vmem:[%s262] sm:$0xf]
          %v546 = vsel %vm453, %v543, 0
          %vm548 = vcmask 1043456
          %v550 = vsel %vm548, %v544, 0
          %552 = vmatprep.subr.bf16.mxu0 0
          %553 = vmatpush1.bf16.msra.mxu0 %v550
          %554 = vmatprep.subr.bf16.mxu0 0
          %555 = vmatpush1.bf16.msra.mxu0 0
          %556 = vmatprep.subr.bf16.mxu0 0
          %557 = vmatpush1.bf16.msra.mxu0 0
          %558 = vmatprep.subr.bf16.mxu0 0
          %559 = vmatpush1.bf16.msra.mxu0 0
          %560 = vmatprep.subr.bf16.mxu0 0
          %561 = vmatpush1.bf16.msra.mxu0 0
          %562 = vmatprep.subr.bf16.mxu0 0
          %563 = vmatpush1.bf16.msra.mxu0 0
          %564 = vmatprep.subr.bf16.mxu0 0
          %565 = vmatpush1.bf16.msra.mxu0 0
          %566 = vmatprep.subr.bf16.mxu0 0
          %567 = vmatpush1.bf16.msra.mxu0 0
          %568 = vmatprep.subr.bf16.mxu0 0
          %569 = vmatpush1.bf16.msra.mxu0 0
          %570 = vmatprep.subr.bf16.mxu0 0
          %571 = vmatpush1.bf16.msra.mxu0 0
          %572 = vmatprep.subr.bf16.mxu0 0
          %573 = vmatpush1.bf16.msra.mxu0 0
          %574 = vmatprep.subr.bf16.mxu0 0
          %575 = vmatpush1.bf16.msra.mxu0 0
          %576 = vmatprep.subr.bf16.mxu0 0
          %577 = vmatpush1.bf16.msra.mxu0 0
          %578 = vmatprep.subr.bf16.mxu0 0
          %579 = vmatpush1.bf16.msra.mxu0 0
          %580 = vmatprep.subr.bf16.mxu0 0
          %581 = vmatpush1.bf16.msra.mxu0 0
          %582 = vmatprep.subr.bf16.mxu0 0
          %583 = vmatpush1.bf16.msra.mxu0 0
          %584 = vmatprep.mubr.bf16.mxu0 0
          %585 = vmatmul.mubr.bf16.gmra.mrb[0].mxu0 %v546
          %v586 = vpop.f32.mrb[0].mxu0
          %v587 = vadd.f32 0.0, %v586
          %v588 = vpop.f32.mrb[0].mxu0
          %v589 = vpop.f32.mrb[0].mxu0
          %v590 = vpop.f32.mrb[0].mxu0
          %591 = vdwg.mxu0
          %v592 = vadd.f32 %v542, %v587
          %593 = vst.msk [vmem:[#allocation4] sm:$0xff] %vm453, %v592
          %594 = vst.msk [vmem:[#allocation2] sm:$0xff] %vm534, %v516
          %v595 = vld [vmem:[#allocation3] sm:$0xff]
          %v596 = vrcp.pop %v595
          %v597 = vld [vmem:[#allocation4] sm:$0xff]
          %599 = vset.pattern.permute.xlu0 0
          %600 = vperm.xlu0 %599, %v596
          %v601 = vpop.permute.xlu0 %600
          %v603 = vmul.f32 %v597, %v601
          %v604 = vpack.c.bf16 %v603, %v603
          %vm605 = vcmask 60416
          %606 = vst.msk [vmem:[%s294] sm:$0xf] %vm605, %v604
        $region56: #{causal_self_attention.4} parent=31 // pred_fallthru
          _
        %s607 = sand.u32 %s141, 1
        %s608 = scalar_lea.sflag [#allocation10], %s607
        %s609 = sand.u32 %s141, 1
        %s610 = smul.addr %s609, 4
        %s611 = scalar_lea.vmem [#allocation14], %s610
        // Predicated region
        $region57: #{causal_self_attention.4} parent=31 // pred_check
          %p612 = pneg %p151
        $region58: #{causal_self_attention.4} parent=31 // pred_check_branch
          %614 = sbr.rel (%p612) target = $region60
        $region59: #{causal_self_attention.4} parent=31 // pred_region
          %s615 = sld [smem:[#allocation6 + %s32]]
          %s617 = ssub.s32 64, 64
          %618 = vsyncadd %s608, %s617
          %s619 = sadd.s32 %s615, %s31
          %s620 = smul.addr %s619, 64
          %s621 = scalar_lea.hbm %s5, %s620
          %s623 = sshll.u32 %s611, 4
          %s624 = int_to_ptr.vmem [resolvable:$true] %s623
          %626 = dma.vmem_to_hbm [thread:$0]  %s624, 64, %s621, %s608
        $region60: #{causal_self_attention.4} parent=31 // pred_fallthru
          _
      $region32: #{causal_self_attention.4} parent=5 // pred_fallthru
        _
      %p627 = scmp.le.s32.totalorder 2, %s22
      // Predicated region
      $region61: #{causal_self_attention.4} parent=5 // pred_check
        %p628 = pneg %p627
      $region62: #{causal_self_attention.4} parent=5 // pred_check_branch
        %630 = sbr.rel (%p628) target = $region64
      $region63: #{causal_self_attention.4} parent=5 // pred_region
        %s631 = ssub.s32 %s22, 2
        // Predicated region
        $region65: #{causal_self_attention.4} parent=63 // pred_check
          %p632 = pneg %p157
        $region66: #{causal_self_attention.4} parent=63 // pred_check_branch
          %634 = sbr.rel (%p632) target = $region68
        $region67: #{causal_self_attention.4} parent=63 // pred_region
          %s635 = sand.u32 %s142, 1
          %s636 = scalar_lea.sflag [#allocation10], %s635
          %s637 = sand.u32 %s142, 1
          %s638 = smul.addr %s637, 4
          %s639 = scalar_lea.vmem [#allocation14], %s638
          %640 = dma.done %s636, 64
        $region68: #{causal_self_attention.4} parent=63 // pred_fallthru
          _
      $region64: #{causal_self_attention.4} parent=5 // pred_fallthru
        _
    $region6: #{causal_self_attention.4} parent=1 // loop_footer
      %s26 = sadd.s32 1, %s22
    $region7: #{causal_self_attention.4} parent=1 // loop_footer_branch
      %21 = sbr.rel target = $region3
    $region8: #{causal_self_attention.4} parent=1 // loop_exit
      _
    %641 = vsyncpa [#allocation9], 1
    %s642 = scalar_lea.sflag [#allocation9], 1
    %643 = vsyncpa %s642, 1
    %644 = vsyncpa [#allocation12], 1
    %s645 = scalar_lea.sflag [#allocation12], 1
    %646 = vsyncpa %s645, 1
    %647 = vsyncpa [#allocation10], 1
    %s648 = scalar_lea.sflag [#allocation10], 1
    %649 = vsyncpa %s648, 1

</llo_original>
